<compile_context>
chip_gen: v7x
topology: tpu7x:2x2x1
jax: 0.10.0
libtpu: 0.0.40
codegen_flags: <defaults>
</compile_context>

<pallas_src>
import functools

import jax
import jax.numpy as jnp
from jax.experimental import pallas as pl
from jax.experimental.pallas import tpu as pltpu

EPS = 1e-5           # torch LayerNorm default eps
NEG_SLOPE = 0.02     # LeakyReLU negative_slope
LANE = 128


def _round_up(n, m):
    return ((n + m - 1) // m) * m


def _cdiv(a, b):
    return -(-a // b)


def _leaky_relu(x):
    # max(x, 0.02*x) == LeakyReLU(negative_slope=0.02) for slopes in [0, 1].
    return jnp.maximum(x, NEG_SLOPE * x)


def _layernorm(x, w, b, n_real):
    """LayerNorm over the last axis.  `x` may carry zero-padded lanes past
    `n_real`; zeros do not perturb sum / sum-of-squares, so one-pass stats over
    the full lane width divided by the REAL width are exact (biased variance,
    matching torch).  Invariant: padded lanes of w/b are zero (enforced in the
    wrapper), which keeps the padded lanes of the result exactly zero."""
    inv_n = 1.0 / float(n_real)
    s = jnp.sum(x, axis=-1, keepdims=True)
    sq = jnp.sum(x * x, axis=-1, keepdims=True)
    mu = s * inv_n
    var = jnp.maximum(sq * inv_n - mu * mu, 0.0)
    return (x - mu) * jax.lax.rsqrt(var + EPS) * w + b


def temporal_layer_kernel(x_ref, t_ref,
                          n1w_ref, n1b_ref, n2w_ref, n2b_ref,
                          fc1_ref, encw_ref, encb_ref, fc2_ref, skip_ref,
                          o_ref, *, fout):
    mm = fc1_ref.dtype                       # MXU operand dtype (bf16 or f32)
    x = x_ref[...].astype(jnp.float32)       # (bb, Fin) -- unpadded, narrow lanes
    t = t_ref[...]                           # (bb, Ft)

    # out = fc1(lrelu(norm1(x))) + enc(t_emb)    -- two narrow-K dots + VPU add
    h = _leaky_relu(_layernorm(x, n1w_ref[...], n1b_ref[...], x.shape[-1]))
    out = (jnp.dot(h.astype(mm), fc1_ref[...], preferred_element_type=jnp.float32)
           + jnp.dot(t.astype(mm), encw_ref[...], preferred_element_type=jnp.float32)
           + encb_ref[...])                  # (bb, Fout_p); lanes >= fout are exactly 0

    # y = fc2(lrelu(norm2(out))) + skip(x)
    h2 = _leaky_relu(_layernorm(out, n2w_ref[...], n2b_ref[...], fout))
    y = (jnp.dot(h2.astype(mm), fc2_ref[...], preferred_element_type=jnp.float32)
         + jnp.dot(x.astype(mm), skip_ref[...], preferred_element_type=jnp.float32))

    o_ref[...] = y.astype(o_ref.dtype)


def _has_two_tensorcores():
    """Crude v7x detection (2 TensorCores/chip); v5e/v6e have a single TC."""
    try:
        kind = jax.devices()[0].device_kind.lower()
    except Exception:
        return False
    return "7" in kind


def _pick_block_b(B, two_tc):
    b8 = _round_up(B, 8)
    cap = 1024                        # big tiles: each grid step costs ~0.35 us
    if two_tc and b8 > 8:
        # Even 2-way batch split so the "parallel" grid axis shards across the
        # two v7x TensorCores.
        return min(cap, _round_up(_cdiv(b8, 2), 8))
    return min(cap, b8)               # single TC: one large tile, no forced split


def temporal_layer(x, t_emb, params, *, block_b=None, compute_dtype=jnp.bfloat16):
    """x: (B, Fin), t_emb: (B, Ft) -> (B, Fout).  `compute_dtype` is the MXU
    operand dtype (accumulation is always f32)."""
    B, Fin = x.shape
    _, Ft = t_emb.shape
    Fout = params["fc1_w"].shape[1]
    Fout_p = _round_up(Fout, LANE)

    if block_b is None:
        block_b = _pick_block_b(B, _has_two_tensorcores())
    block_b = max(8, (block_b // 8) * 8)
    B_p = _round_up(B, block_b)

    def pad_cols(a, cols):
        return jnp.pad(a, ((0, 0), (0, cols - a.shape[1])))

    def pad_row(v, cols):
        return jnp.pad(v, (0, cols - v.shape[0])).reshape(1, cols)

    # Zero-padding invariant (required for the padded LayerNorm to be exact and
    # for padded output lanes to stay zero): every padded row/column of the
    # weights and every padded lane of norm2 / enc bias below MUST be zero.
    fc1 = pad_cols(params["fc1_w"], Fout_p).astype(compute_dtype)       # (Fin, Fout_p)
    encw = pad_cols(params["enc_w"], Fout_p).astype(compute_dtype)      # (Ft,  Fout_p)
    skip_w = params.get("skip_w")
    if skip_w is None:                                                   # Identity skip
        skip_w = jnp.eye(Fin, Fout, dtype=jnp.float32)
    skipw = pad_cols(skip_w, Fout_p).astype(compute_dtype)              # (Fin, Fout_p)
    fc2 = jnp.pad(params["fc2_w"],
                  ((0, Fout_p - Fout), (0, Fout_p - Fout))).astype(compute_dtype)
    encb = pad_row(params["enc_b"], Fout_p)                              # (1, Fout_p) f32
    n1w = params["norm1_w"].reshape(1, Fin)
    n1b = params["norm1_b"].reshape(1, Fin)
    n2w = pad_row(params["norm2_w"], Fout_p)
    n2b = pad_row(params["norm2_b"], Fout_p)

    # Only the batch dim of activations may need padding; feature dims stay
    # unpadded (full-extent last-dim blocks) to avoid 8-16x inflated activation
    # traffic through HBM.
    x_p = jnp.pad(x, ((0, B_p - B), (0, 0)))
    t_p = jnp.pad(t_emb, ((0, B_p - B), (0, 0)))

    grid = (B_p // block_b,)

    in_specs = [
        pl.BlockSpec((block_b, Fin), lambda i: (i, 0)),        # x (unpadded lanes)
        pl.BlockSpec((block_b, Ft), lambda i: (i, 0)),         # t_emb
        pl.BlockSpec((1, Fin), lambda i: (0, 0)),              # norm1.weight
        pl.BlockSpec((1, Fin), lambda i: (0, 0)),              # norm1.bias
        pl.BlockSpec((1, Fout_p), lambda i: (0, 0)),           # norm2.weight
        pl.BlockSpec((1, Fout_p), lambda i: (0, 0)),           # norm2.bias
        pl.BlockSpec((Fin, Fout_p), lambda i: (0, 0)),         # fc1.weight^T
        pl.BlockSpec((Ft, Fout_p), lambda i: (0, 0)),          # enc.weight^T
        pl.BlockSpec((1, Fout_p), lambda i: (0, 0)),           # enc.bias
        pl.BlockSpec((Fout_p, Fout_p), lambda i: (0, 0)),      # fc2.weight^T (zero-padded)
        pl.BlockSpec((Fin, Fout_p), lambda i: (0, 0)),         # skip.weight^T
    ]
    out_specs = pl.BlockSpec((block_b, Fout_p), lambda i: (i, 0))   # lane-dense store

    # Explicit scoped-VMEM budget: double-buffered activation/output blocks +
    # single-copy weights + f32 intermediates, with headroom; clamp to 48 MiB.
    wsize = jnp.dtype(compute_dtype).itemsize
    w_bytes = wsize * (2 * Fin + Ft + Fout_p) * Fout_p
    blk_bytes = 2 * 4 * block_b * (Fin + Ft + Fout_p)
    interm_bytes = 6 * 4 * block_b * Fout_p
    vmem_limit = int(min(48 << 20, max(32 << 20, 2 * (w_bytes + blk_bytes + interm_bytes))))

    flops = 2 * B_p * (2 * Fin + Ft + Fout_p) * Fout_p + 12 * B_p * (Fin + 2 * Fout_p)
    bytes_accessed = (4 * B_p * (Fin + Ft + Fout_p) + w_bytes
                      + 4 * (2 * Fin + 3 * Fout_p))
    cost = pl.CostEstimate(flops=int(flops), transcendentals=int(2 * B_p),
                           bytes_accessed=int(bytes_accessed))

    out_p = pl.pallas_call(
        functools.partial(temporal_layer_kernel, fout=Fout),
        out_shape=jax.ShapeDtypeStruct((B_p, Fout_p), x.dtype),
        grid_spec=pltpu.PrefetchScalarGridSpec(
            num_scalar_prefetch=0,
            grid=grid,
            in_specs=in_specs,
            out_specs=out_specs,
        ),
        compiler_params=pltpu.CompilerParams(
            dimension_semantics=("parallel",),
            vmem_limit_bytes=vmem_limit),
        cost_estimate=cost,
    )(x_p, t_p, n1w, n1b, n2w, n2b, fc1, encw, encb, fc2, skipw)

    return out_p[:B, :Fout]


def temporal_layer_ref(x, t_emb, p):
    """Pure-JAX reference mirroring the PyTorch forward."""
    def ln(v, w, b):
        mu = jnp.mean(v, -1, keepdims=True)
        var = jnp.mean((v - mu) ** 2, -1, keepdims=True)
        return (v - mu) / jnp.sqrt(var + EPS) * w + b

    lrelu = lambda v: jnp.where(v >= 0, v, NEG_SLOPE * v)
    out = lrelu(ln(x, p["norm1_w"], p["norm1_b"])) @ p["fc1_w"]
    out = out + t_emb @ p["enc_w"] + p["enc_b"]
    out = lrelu(ln(out, p["norm2_w"], p["norm2_b"])) @ p["fc2_w"]
    skip = x @ p["skip_w"] if "skip_w" in p else x
    return out + skip


def init_params(key, in_features, out_features, temporal_features):
    ks = jax.random.split(key, 5)
    scale = 0.1
    return {
        # LayerNorm affine params (torch default: ones / zeros)
        "norm1_w": jnp.ones((in_features,), jnp.float32),
        "norm1_b": jnp.zeros((in_features,), jnp.float32),
        "norm2_w": jnp.ones((out_features,), jnp.float32),
        "norm2_b": jnp.zeros((out_features,), jnp.float32),
        # Linear weights stored as (in, out) == torch weight.T
        "fc1_w": scale * jax.random.normal(ks[0], (in_features, out_features), jnp.float32),
        "fc2_w": scale * jax.random.normal(ks[1], (out_features, out_features), jnp.float32),
        "enc_w": scale * jax.random.normal(ks[2], (temporal_features, out_features), jnp.float32),
        "enc_b": scale * jax.random.normal(ks[3], (out_features,), jnp.float32),
        # in_features != out_features -> skip is a bias-free Linear
        "skip_w": scale * jax.random.normal(ks[4], (in_features, out_features), jnp.float32),
    }


if __name__ == "__main__":
    # Toy-model shapes; B=256 exercises the batch tiling.
    B, Fin, Fout, Ft = 256, 16, 32, 8

    key = jax.random.PRNGKey(0)
    kx, kt, kp = jax.random.split(key, 3)
    x = jax.random.normal(kx, (B, Fin), jnp.float32)
    t_emb = jax.random.normal(kt, (B, Ft), jnp.float32)
    params = init_params(kp, Fin, Fout, Ft)

    ref = temporal_layer_ref(x, t_emb, params)

    # Exact-precision path (f32 matmul operands): tight tolerance.
    out_f32 = jax.block_until_ready(
        temporal_layer(x, t_emb, params, compute_dtype=jnp.float32))
    assert out_f32.shape == (B, Fout)
    assert jnp.allclose(out_f32, ref, atol=1e-4, rtol=1e-4), "f32 mismatch vs reference"

    # Default fast path (bf16 matmul operands, f32 accumulation): loose tolerance.
    out_bf16 = jax.block_until_ready(temporal_layer(x, t_emb, params))
    assert out_bf16.shape == (B, Fout)
    assert jnp.allclose(out_bf16, ref, atol=3e-2, rtol=3e-2), "bf16 mismatch vs reference"

    print("KERNEL_OK")
</pallas_src>

<mosaic_0001>
module attributes {stable_mosaic.version = 11 : i64} {
  func.func @temporal_layer_kernel(%arg0: i32, %arg1: memref<256x16xf32, #tpu.memory_space<vmem>>, %arg2: memref<256x8xf32, #tpu.memory_space<vmem>>, %arg3: memref<1x16xf32, #tpu.memory_space<vmem>>, %arg4: memref<1x16xf32, #tpu.memory_space<vmem>>, %arg5: memref<1x128xf32, #tpu.memory_space<vmem>>, %arg6: memref<1x128xf32, #tpu.memory_space<vmem>>, %arg7: memref<16x128xf32, #tpu.memory_space<vmem>>, %arg8: memref<8x128xf32, #tpu.memory_space<vmem>>, %arg9: memref<1x128xf32, #tpu.memory_space<vmem>>, %arg10: memref<128x128xf32, #tpu.memory_space<vmem>>, %arg11: memref<16x128xf32, #tpu.memory_space<vmem>>, %arg12: memref<256x128xf32, #tpu.memory_space<vmem>>) attributes {dimension_semantics = [#tpu.dimension_semantics<parallel>], iteration_bounds = array<i64: 1>, scalar_prefetch = 0 : i64, scratch_operands = 0 : i64, tpu.core_type = #tpu.core_type<tc>, window_params = [{transform_indices = @transform_0, window_bounds = array<i64: 256, 16>}, {transform_indices = @transform_1, window_bounds = array<i64: 256, 8>}, {pipeline_mode = #tpu.pipeline_mode<synchronous>, transform_indices = @transform_2, window_bounds = array<i64: 1, 16>}, {pipeline_mode = #tpu.pipeline_mode<synchronous>, transform_indices = @transform_3, window_bounds = array<i64: 1, 16>}, {pipeline_mode = #tpu.pipeline_mode<synchronous>, transform_indices = @transform_4, window_bounds = array<i64: 1, 128>}, {pipeline_mode = #tpu.pipeline_mode<synchronous>, transform_indices = @transform_5, window_bounds = array<i64: 1, 128>}, {pipeline_mode = #tpu.pipeline_mode<synchronous>, transform_indices = @transform_6, window_bounds = array<i64: 16, 128>}, {pipeline_mode = #tpu.pipeline_mode<synchronous>, transform_indices = @transform_7, window_bounds = array<i64: 8, 128>}, {pipeline_mode = #tpu.pipeline_mode<synchronous>, transform_indices = @transform_8, window_bounds = array<i64: 1, 128>}, {pipeline_mode = #tpu.pipeline_mode<synchronous>, transform_indices = @transform_9, window_bounds = array<i64: 128, 128>}, {pipeline_mode = #tpu.pipeline_mode<synchronous>, transform_indices = @transform_10, window_bounds = array<i64: 16, 128>}, {transform_indices = @transform_11, window_bounds = array<i64: 256, 128>}]} {
    %c0 = arith.constant 0 : index
    %c0_0 = arith.constant 0 : index
    %0 = vector.load %arg1[%c0, %c0_0] : memref<256x16xf32, #tpu.memory_space<vmem>>, vector<256x16xf32>
    %c0_1 = arith.constant 0 : index
    %c0_2 = arith.constant 0 : index
    %1 = vector.load %arg2[%c0_1, %c0_2] : memref<256x8xf32, #tpu.memory_space<vmem>>, vector<256x8xf32>
    %c0_3 = arith.constant 0 : index
    %c0_4 = arith.constant 0 : index
    %2 = vector.load %arg3[%c0_3, %c0_4] : memref<1x16xf32, #tpu.memory_space<vmem>>, vector<1x16xf32>
    %c0_5 = arith.constant 0 : index
    %c0_6 = arith.constant 0 : index
    %3 = vector.load %arg4[%c0_5, %c0_6] : memref<1x16xf32, #tpu.memory_space<vmem>>, vector<1x16xf32>
    %cst = arith.constant dense<0.000000e+00> : vector<256xf32>
    %4 = vector.multi_reduction <add>, %0, %cst [1] : vector<256x16xf32> to vector<256xf32>
    %5 = vector.shape_cast %4 : vector<256xf32> to vector<256x1xf32>
    %6 = arith.mulf %0, %0 : vector<256x16xf32>
    %cst_7 = arith.constant dense<0.000000e+00> : vector<256xf32>
    %7 = vector.multi_reduction <add>, %6, %cst_7 [1] : vector<256x16xf32> to vector<256xf32>
    %8 = vector.shape_cast %7 : vector<256xf32> to vector<256x1xf32>
    %cst_8 = arith.constant 6.250000e-02 : f32
    %9 = vector.broadcast %cst_8 : f32 to vector<256x1xf32>
    %10 = arith.mulf %5, %9 : vector<256x1xf32>
    %cst_9 = arith.constant 6.250000e-02 : f32
    %11 = vector.broadcast %cst_9 : f32 to vector<256x1xf32>
    %12 = arith.mulf %8, %11 : vector<256x1xf32>
    %13 = arith.mulf %10, %10 : vector<256x1xf32>
    %14 = arith.subf %12, %13 : vector<256x1xf32>
    %cst_10 = arith.constant 0.000000e+00 : f32
    %15 = vector.broadcast %cst_10 : f32 to vector<256x1xf32>
    %16 = arith.maximumf %14, %15 : vector<256x1xf32>
    %17 = vector.broadcast %10 : vector<256x1xf32> to vector<256x16xf32>
    %18 = arith.subf %0, %17 : vector<256x16xf32>
    %cst_11 = arith.constant 9.99999974E-6 : f32
    %19 = vector.broadcast %cst_11 : f32 to vector<256x1xf32>
    %20 = arith.addf %16, %19 : vector<256x1xf32>
    %21 = math.rsqrt %20 : vector<256x1xf32>
    %22 = vector.broadcast %21 : vector<256x1xf32> to vector<256x16xf32>
    %23 = arith.mulf %18, %22 : vector<256x16xf32>
    %24 = vector.broadcast %2 : vector<1x16xf32> to vector<256x16xf32>
    %25 = arith.mulf %23, %24 : vector<256x16xf32>
    %26 = vector.broadcast %3 : vector<1x16xf32> to vector<256x16xf32>
    %27 = arith.addf %25, %26 : vector<256x16xf32>
    %cst_12 = arith.constant 2.000000e-02 : f32
    %28 = vector.broadcast %cst_12 : f32 to vector<256x16xf32>
    %29 = arith.mulf %28, %27 : vector<256x16xf32>
    %30 = arith.maximumf %27, %29 : vector<256x16xf32>
    %c0_13 = arith.constant 0 : index
    %c0_14 = arith.constant 0 : index
    %31 = vector.load %arg7[%c0_13, %c0_14] : memref<16x128xf32, #tpu.memory_space<vmem>>, vector<16x128xf32>
    %cst_15 = arith.constant dense<0.000000e+00> : vector<256x128xf32>
    %32 = tpu.matmul %30, %31, %cst_15 {dimension_numbers = #tpu.dot_dimension_numbers<[1], [0], [0], [1], [0, 0, 1, 1], [], []>} : vector<256x16xf32>, vector<16x128xf32>, vector<256x128xf32> -> vector<256x128xf32>
    %c0_16 = arith.constant 0 : index
    %c0_17 = arith.constant 0 : index
    %33 = vector.load %arg8[%c0_16, %c0_17] : memref<8x128xf32, #tpu.memory_space<vmem>>, vector<8x128xf32>
    %cst_18 = arith.constant dense<0.000000e+00> : vector<256x128xf32>
    %34 = tpu.matmul %1, %33, %cst_18 {dimension_numbers = #tpu.dot_dimension_numbers<[1], [0], [0], [1], [0, 0, 1, 1], [], []>} : vector<256x8xf32>, vector<8x128xf32>, vector<256x128xf32> -> vector<256x128xf32>
    %35 = arith.addf %32, %34 : vector<256x128xf32>
    %c0_19 = arith.constant 0 : index
    %c0_20 = arith.constant 0 : index
    %36 = vector.load %arg9[%c0_19, %c0_20] : memref<1x128xf32, #tpu.memory_space<vmem>>, vector<1x128xf32>
    %37 = vector.broadcast %36 : vector<1x128xf32> to vector<256x128xf32>
    %38 = arith.addf %35, %37 : vector<256x128xf32>
    %c0_21 = arith.constant 0 : index
    %c0_22 = arith.constant 0 : index
    %39 = vector.load %arg5[%c0_21, %c0_22] : memref<1x128xf32, #tpu.memory_space<vmem>>, vector<1x128xf32>
    %c0_23 = arith.constant 0 : index
    %c0_24 = arith.constant 0 : index
    %40 = vector.load %arg6[%c0_23, %c0_24] : memref<1x128xf32, #tpu.memory_space<vmem>>, vector<1x128xf32>
    %cst_25 = arith.constant dense<0.000000e+00> : vector<256xf32>
    %41 = vector.multi_reduction <add>, %38, %cst_25 [1] : vector<256x128xf32> to vector<256xf32>
    %42 = vector.shape_cast %41 : vector<256xf32> to vector<256x1xf32>
    %43 = arith.mulf %38, %38 : vector<256x128xf32>
    %cst_26 = arith.constant dense<0.000000e+00> : vector<256xf32>
    %44 = vector.multi_reduction <add>, %43, %cst_26 [1] : vector<256x128xf32> to vector<256xf32>
    %45 = vector.shape_cast %44 : vector<256xf32> to vector<256x1xf32>
    %cst_27 = arith.constant 3.125000e-02 : f32
    %46 = vector.broadcast %cst_27 : f32 to vector<256x1xf32>
    %47 = arith.mulf %42, %46 : vector<256x1xf32>
    %cst_28 = arith.constant 3.125000e-02 : f32
    %48 = vector.broadcast %cst_28 : f32 to vector<256x1xf32>
    %49 = arith.mulf %45, %48 : vector<256x1xf32>
    %50 = arith.mulf %47, %47 : vector<256x1xf32>
    %51 = arith.subf %49, %50 : vector<256x1xf32>
    %cst_29 = arith.constant 0.000000e+00 : f32
    %52 = vector.broadcast %cst_29 : f32 to vector<256x1xf32>
    %53 = arith.maximumf %51, %52 : vector<256x1xf32>
    %54 = vector.broadcast %47 : vector<256x1xf32> to vector<256x128xf32>
    %55 = arith.subf %38, %54 : vector<256x128xf32>
    %cst_30 = arith.constant 9.99999974E-6 : f32
    %56 = vector.broadcast %cst_30 : f32 to vector<256x1xf32>
    %57 = arith.addf %53, %56 : vector<256x1xf32>
    %58 = math.rsqrt %57 : vector<256x1xf32>
    %59 = vector.broadcast %58 : vector<256x1xf32> to vector<256x128xf32>
    %60 = arith.mulf %55, %59 : vector<256x128xf32>
    %61 = vector.broadcast %39 : vector<1x128xf32> to vector<256x128xf32>
    %62 = arith.mulf %60, %61 : vector<256x128xf32>
    %63 = vector.broadcast %40 : vector<1x128xf32> to vector<256x128xf32>
    %64 = arith.addf %62, %63 : vector<256x128xf32>
    %cst_31 = arith.constant 2.000000e-02 : f32
    %65 = vector.broadcast %cst_31 : f32 to vector<256x128xf32>
    %66 = arith.mulf %65, %64 : vector<256x128xf32>
    %67 = arith.maximumf %64, %66 : vector<256x128xf32>
    %c0_32 = arith.constant 0 : index
    %c0_33 = arith.constant 0 : index
    %68 = vector.load %arg10[%c0_32, %c0_33] : memref<128x128xf32, #tpu.memory_space<vmem>>, vector<128x128xf32>
    %cst_34 = arith.constant dense<0.000000e+00> : vector<256x128xf32>
    %69 = tpu.matmul %67, %68, %cst_34 {dimension_numbers = #tpu.dot_dimension_numbers<[1], [0], [0], [1], [0, 0, 1, 1], [], []>} : vector<256x128xf32>, vector<128x128xf32>, vector<256x128xf32> -> vector<256x128xf32>
    %c0_35 = arith.constant 0 : index
    %c0_36 = arith.constant 0 : index
    %70 = vector.load %arg11[%c0_35, %c0_36] : memref<16x128xf32, #tpu.memory_space<vmem>>, vector<16x128xf32>
    %cst_37 = arith.constant dense<0.000000e+00> : vector<256x128xf32>
    %71 = tpu.matmul %0, %70, %cst_37 {dimension_numbers = #tpu.dot_dimension_numbers<[1], [0], [0], [1], [0, 0, 1, 1], [], []>} : vector<256x16xf32>, vector<16x128xf32>, vector<256x128xf32> -> vector<256x128xf32>
    %72 = arith.addf %69, %71 : vector<256x128xf32>
    %c0_38 = arith.constant 0 : index
    %c0_39 = arith.constant 0 : index
    %73 = vector.load %arg12[%c0_38, %c0_39] : memref<256x128xf32, #tpu.memory_space<vmem>>, vector<256x128xf32>
    tpu.vector_store %arg12[%c0_38, %c0_39], %72 {strides = array<i32>} : memref<256x128xf32, #tpu.memory_space<vmem>>, vector<256x128xf32>,
    return
  }
  func.func @transform_0(%arg0: i32) -> (i32, i32) {
    %c0_i32 = arith.constant 0 : i32
    %c0_i32_0 = arith.constant 0 : i32
    return %arg0, %c0_i32 : i32, i32
  }
  func.func @transform_1(%arg0: i32) -> (i32, i32) {
    %c0_i32 = arith.constant 0 : i32
    %c0_i32_0 = arith.constant 0 : i32
    return %arg0, %c0_i32 : i32, i32
  }
  func.func @transform_2(%arg0: i32) -> (i32, i32) {
    %c0_i32 = arith.constant 0 : i32
    %c0_i32_0 = arith.constant 0 : i32
    %c0_i32_1 = arith.constant 0 : i32
    return %c0_i32, %c0_i32_0 : i32, i32
  }
  func.func @transform_3(%arg0: i32) -> (i32, i32) {
    %c0_i32 = arith.constant 0 : i32
    %c0_i32_0 = arith.constant 0 : i32
    %c0_i32_1 = arith.constant 0 : i32
    return %c0_i32, %c0_i32_0 : i32, i32
  }
  func.func @transform_4(%arg0: i32) -> (i32, i32) {
    %c0_i32 = arith.constant 0 : i32
    %c0_i32_0 = arith.constant 0 : i32
    %c0_i32_1 = arith.constant 0 : i32
    return %c0_i32, %c0_i32_0 : i32, i32
  }
  func.func @transform_5(%arg0: i32) -> (i32, i32) {
    %c0_i32 = arith.constant 0 : i32
    %c0_i32_0 = arith.constant 0 : i32
    %c0_i32_1 = arith.constant 0 : i32
    return %c0_i32, %c0_i32_0 : i32, i32
  }
  func.func @transform_6(%arg0: i32) -> (i32, i32) {
    %c0_i32 = arith.constant 0 : i32
    %c0_i32_0 = arith.constant 0 : i32
    %c0_i32_1 = arith.constant 0 : i32
    return %c0_i32, %c0_i32_0 : i32, i32
  }
  func.func @transform_7(%arg0: i32) -> (i32, i32) {
    %c0_i32 = arith.constant 0 : i32
    %c0_i32_0 = arith.constant 0 : i32
    %c0_i32_1 = arith.constant 0 : i32
    return %c0_i32, %c0_i32_0 : i32, i32
  }
  func.func @transform_8(%arg0: i32) -> (i32, i32) {
    %c0_i32 = arith.constant 0 : i32
    %c0_i32_0 = arith.constant 0 : i32
    %c0_i32_1 = arith.constant 0 : i32
    return %c0_i32, %c0_i32_0 : i32, i32
  }
  func.func @transform_9(%arg0: i32) -> (i32, i32) {
    %c0_i32 = arith.constant 0 : i32
    %c0_i32_0 = arith.constant 0 : i32
    %c0_i32_1 = arith.constant 0 : i32
    return %c0_i32, %c0_i32_0 : i32, i32
  }
  func.func @transform_10(%arg0: i32) -> (i32, i32) {
    %c0_i32 = arith.constant 0 : i32
    %c0_i32_0 = arith.constant 0 : i32
    %c0_i32_1 = arith.constant 0 : i32
    return %c0_i32, %c0_i32_0 : i32, i32
  }
  func.func @transform_11(%arg0: i32) -> (i32, i32) {
    %c0_i32 = arith.constant 0 : i32
    %c0_i32_0 = arith.constant 0 : i32
    return %arg0, %c0_i32 : i32, i32
  }
}

</mosaic_0001>

<llo_original>
// kernel: tpu_custom_call.1
$region0: #{tpu_custom_call.1}
  #allocation0 [shape = 'u32[]', space=smem, size = 0x4, offset = 0x4, fixed_abs, tag = 'smem constant byte address 0x4 - core index']
  #allocation1 [shape = 'u32[144,128]{1,0:T(1,128)}', space=vmem, size = 0x12000, scoped, tag = 'internal scratch']
  %s0 = inlined_call_operand.vmem [shape: f32[256,16], index: 0, kind: input, shape index: {}]
  %s1 = inlined_call_operand.vmem [shape: f32[256,8], index: 1, kind: input, shape index: {}]
  %s2 = inlined_call_operand.vmem [shape: f32[1,16], index: 2, kind: input, shape index: {}]
  %s3 = inlined_call_operand.vmem [shape: f32[1,16], index: 3, kind: input, shape index: {}]
  %s4 = inlined_call_operand.vmem [shape: f32[1,128], index: 4, kind: input, shape index: {}]
  %s5 = inlined_call_operand.vmem [shape: f32[1,128], index: 5, kind: input, shape index: {}]
  %s6 = inlined_call_operand.vmem [shape: f32[16,128], index: 6, kind: input, shape index: {}]
  %s7 = inlined_call_operand.vmem [shape: f32[8,128], index: 7, kind: input, shape index: {}]
  %s8 = inlined_call_operand.vmem [shape: f32[1,128], index: 8, kind: input, shape index: {}]
  %s9 = inlined_call_operand.vmem [shape: f32[128,128], index: 9, kind: input, shape index: {}]
  %s10 = inlined_call_operand.vmem [shape: f32[16,128], index: 10, kind: input, shape index: {}]
  %s11 = inlined_call_operand.hbm [shape: f32[256,128], index: 11, kind: output, shape index: {}]
  %s12 = sld [smem:[#allocation0]]
  $region54: #{tpu_custom_call.1} parent=0
    _
  %s14 = ssub.s32 1, %s12
  %s15 = scalar_select 0, %s14, %s12
  $region1: #{tpu_custom_call.1} parent=0
    #allocation2 [shape = 'u8[131072]{0}', space=vmem, size = 0x20000, scoped, tag = 'output window, operand 0, single buffered']
    #allocation3 [shape = 's32[1]{0}', space=sflag, size = 0x4, scoped, tag = 'scoped memory for tpu_custom_call.1']
    %16 = vsyncpa [#allocation3], 0
    // Predicated region
    $region2: #{tpu_custom_call.1} parent=1 // pred_check
      _
    $region3: #{tpu_custom_call.1} parent=1 // pred_check_branch
      %18 = sbr.rel (0) target = $region5
    $region4: #{tpu_custom_call.1} parent=1 // pred_region
      _
    $region5: #{tpu_custom_call.1} parent=1 // pred_fallthru
      _
    // Predicated region
    $region6: #{tpu_custom_call.1} parent=1 // pred_check
      _
    $region7: #{tpu_custom_call.1} parent=1 // pred_check_branch
      %20 = sbr.rel (0) target = $region9
    $region8: #{tpu_custom_call.1} parent=1 // pred_region
      _
    $region9: #{tpu_custom_call.1} parent=1 // pred_fallthru
      _
    // Predicated region
    $region10: #{tpu_custom_call.1} parent=1 // pred_check
      _
    $region11: #{tpu_custom_call.1} parent=1 // pred_check_branch
      %22 = sbr.rel (0) target = $region13
    $region12: #{tpu_custom_call.1} parent=1 // pred_region
      _
    $region13: #{tpu_custom_call.1} parent=1 // pred_fallthru
      _
    // Predicated region
    $region14: #{tpu_custom_call.1} parent=1 // pred_check
      _
    $region15: #{tpu_custom_call.1} parent=1 // pred_check_branch
      %24 = sbr.rel (0) target = $region17
    $region16: #{tpu_custom_call.1} parent=1 // pred_region
      _
    $region17: #{tpu_custom_call.1} parent=1 // pred_fallthru
      _
    // Predicated region
    $region18: #{tpu_custom_call.1} parent=1 // pred_check
      _
    $region19: #{tpu_custom_call.1} parent=1 // pred_check_branch
      %26 = sbr.rel (0) target = $region21
    $region20: #{tpu_custom_call.1} parent=1 // pred_region
      _
    $region21: #{tpu_custom_call.1} parent=1 // pred_fallthru
      _
    // Predicated region
    $region22: #{tpu_custom_call.1} parent=1 // pred_check
      _
    $region23: #{tpu_custom_call.1} parent=1 // pred_check_branch
      %28 = sbr.rel (0) target = $region25
    $region24: #{tpu_custom_call.1} parent=1 // pred_region
      _
    $region25: #{tpu_custom_call.1} parent=1 // pred_fallthru
      _
    // Predicated region
    $region26: #{tpu_custom_call.1} parent=1 // pred_check
      _
    $region27: #{tpu_custom_call.1} parent=1 // pred_check_branch
      %30 = sbr.rel (0) target = $region29
    $region28: #{tpu_custom_call.1} parent=1 // pred_region
      _
    $region29: #{tpu_custom_call.1} parent=1 // pred_fallthru
      _
    // Predicated region
    $region30: #{tpu_custom_call.1} parent=1 // pred_check
      _
    $region31: #{tpu_custom_call.1} parent=1 // pred_check_branch
      %32 = sbr.rel (0) target = $region33
    $region32: #{tpu_custom_call.1} parent=1 // pred_region
      _
    $region33: #{tpu_custom_call.1} parent=1 // pred_fallthru
      _
    // Predicated region
    $region34: #{tpu_custom_call.1} parent=1 // pred_check
      _
    $region35: #{tpu_custom_call.1} parent=1 // pred_check_branch
      %34 = sbr.rel (0) target = $region37
    $region36: #{tpu_custom_call.1} parent=1 // pred_region
      _
    $region37: #{tpu_custom_call.1} parent=1 // pred_fallthru
      _
    // Predicated region
    $region38: #{tpu_custom_call.1} parent=1 // pred_check
      _
    $region39: #{tpu_custom_call.1} parent=1 // pred_check_branch
      %36 = sbr.rel (0) target = $region41
    $region40: #{tpu_custom_call.1} parent=1 // pred_region
      _
    $region41: #{tpu_custom_call.1} parent=1 // pred_fallthru
      _
    // Predicated region
    $region42: #{tpu_custom_call.1} parent=1 // pred_check
      _
    $region43: #{tpu_custom_call.1} parent=1 // pred_check_branch
      %38 = sbr.rel (0) target = $region45
    $region44: #{tpu_custom_call.1} parent=1 // pred_region
      _
    $region45: #{tpu_custom_call.1} parent=1 // pred_fallthru
      _
    %v39 = vld [vmem:[%s0] sm:$0xff]
    %v40 = vld [vmem:[%s0 + $0x8] sm:$0xff]
    %v41 = vld [vmem:[%s0 + $0x10] sm:$0xff]
    %v42 = vld [vmem:[%s0 + $0x18] sm:$0xff]
    %v43 = vld [vmem:[%s0 + $0x20] sm:$0xff]
    %v44 = vld [vmem:[%s0 + $0x28] sm:$0xff]
    %v45 = vld [vmem:[%s0 + $0x30] sm:$0xff]
    %v46 = vld [vmem:[%s0 + $0x38] sm:$0xff]
    %v47 = vld [vmem:[%s0 + $0x40] sm:$0xff]
    %v48 = vld [vmem:[%s0 + $0x48] sm:$0xff]
    %v49 = vld [vmem:[%s0 + $0x50] sm:$0xff]
    %v50 = vld [vmem:[%s0 + $0x58] sm:$0xff]
    %v51 = vld [vmem:[%s0 + $0x60] sm:$0xff]
    %v52 = vld [vmem:[%s0 + $0x68] sm:$0xff]
    %v53 = vld [vmem:[%s0 + $0x70] sm:$0xff]
    %v54 = vld [vmem:[%s0 + $0x78] sm:$0xff]
    %v55 = vld [vmem:[%s0 + $0x80] sm:$0xff]
    %v56 = vld [vmem:[%s0 + $0x88] sm:$0xff]
    %v57 = vld [vmem:[%s0 + $0x90] sm:$0xff]
    %v58 = vld [vmem:[%s0 + $0x98] sm:$0xff]
    %v59 = vld [vmem:[%s0 + $0xa0] sm:$0xff]
    %v60 = vld [vmem:[%s0 + $0xa8] sm:$0xff]
    %v61 = vld [vmem:[%s0 + $0xb0] sm:$0xff]
    %v62 = vld [vmem:[%s0 + $0xb8] sm:$0xff]
    %v63 = vld [vmem:[%s0 + $0xc0] sm:$0xff]
    %v64 = vld [vmem:[%s0 + $0xc8] sm:$0xff]
    %v65 = vld [vmem:[%s0 + $0xd0] sm:$0xff]
    %v66 = vld [vmem:[%s0 + $0xd8] sm:$0xff]
    %v67 = vld [vmem:[%s0 + $0xe0] sm:$0xff]
    %v68 = vld [vmem:[%s0 + $0xe8] sm:$0xff]
    %v69 = vld [vmem:[%s0 + $0xf0] sm:$0xff]
    %v70 = vld [vmem:[%s0 + $0xf8] sm:$0xff]
    %v71 = vld [vmem:[%s1] sm:$0xff]
    %v72 = vld [vmem:[%s1 + $0x8] sm:$0xff]
    %v73 = vld [vmem:[%s1 + $0x10] sm:$0xff]
    %v74 = vld [vmem:[%s1 + $0x18] sm:$0xff]
    %v75 = vld [vmem:[%s1 + $0x20] sm:$0xff]
    %v76 = vld [vmem:[%s1 + $0x28] sm:$0xff]
    %v77 = vld [vmem:[%s1 + $0x30] sm:$0xff]
    %v78 = vld [vmem:[%s1 + $0x38] sm:$0xff]
    %v79 = vld [vmem:[%s1 + $0x40] sm:$0xff]
    %v80 = vld [vmem:[%s1 + $0x48] sm:$0xff]
    %v81 = vld [vmem:[%s1 + $0x50] sm:$0xff]
    %v82 = vld [vmem:[%s1 + $0x58] sm:$0xff]
    %v83 = vld [vmem:[%s1 + $0x60] sm:$0xff]
    %v84 = vld [vmem:[%s1 + $0x68] sm:$0xff]
    %v85 = vld [vmem:[%s1 + $0x70] sm:$0xff]
    %v86 = vld [vmem:[%s1 + $0x78] sm:$0xff]
    %v87 = vld [vmem:[%s1 + $0x80] sm:$0xff]
    %v88 = vld [vmem:[%s1 + $0x88] sm:$0xff]
    %v89 = vld [vmem:[%s1 + $0x90] sm:$0xff]
    %v90 = vld [vmem:[%s1 + $0x98] sm:$0xff]
    %v91 = vld [vmem:[%s1 + $0xa0] sm:$0xff]
    %v92 = vld [vmem:[%s1 + $0xa8] sm:$0xff]
    %v93 = vld [vmem:[%s1 + $0xb0] sm:$0xff]
    %v94 = vld [vmem:[%s1 + $0xb8] sm:$0xff]
    %v95 = vld [vmem:[%s1 + $0xc0] sm:$0xff]
    %v96 = vld [vmem:[%s1 + $0xc8] sm:$0xff]
    %v97 = vld [vmem:[%s1 + $0xd0] sm:$0xff]
    %v98 = vld [vmem:[%s1 + $0xd8] sm:$0xff]
    %v99 = vld [vmem:[%s1 + $0xe0] sm:$0xff]
    %v100 = vld [vmem:[%s1 + $0xe8] sm:$0xff]
    %v101 = vld [vmem:[%s1 + $0xf0] sm:$0xff]
    %v102 = vld [vmem:[%s1 + $0xf8] sm:$0xff]
    %v103 = vld [vmem:[%s2] sm:$0x1]
    %v104 = vld [vmem:[%s3] sm:$0x1]
    %vm105 = vcmask 130048
    %v106 = vsel %vm105, %v39, 0.0
    %107 = vadd.xlane.f32.xlu0 %v106
    %v108 = vpop.xlane.xlu0 %107
    %v109 = vsel %vm105, %v40, 0.0
    %110 = vadd.xlane.f32.xlu0 %v109
    %v111 = vpop.xlane.xlu0 %110
    %v112 = vsel %vm105, %v41, 0.0
    %113 = vadd.xlane.f32.xlu0 %v112
    %v114 = vpop.xlane.xlu0 %113
    %v115 = vsel %vm105, %v42, 0.0
    %116 = vadd.xlane.f32.xlu0 %v115
    %v117 = vpop.xlane.xlu0 %116
    %v118 = vsel %vm105, %v43, 0.0
    %119 = vadd.xlane.f32.xlu0 %v118
    %v120 = vpop.xlane.xlu0 %119
    %v121 = vsel %vm105, %v44, 0.0
    %122 = vadd.xlane.f32.xlu0 %v121
    %v123 = vpop.xlane.xlu0 %122
    %v124 = vsel %vm105, %v45, 0.0
    %125 = vadd.xlane.f32.xlu0 %v124
    %v126 = vpop.xlane.xlu0 %125
    %v127 = vsel %vm105, %v46, 0.0
    %128 = vadd.xlane.f32.xlu0 %v127
    %v129 = vpop.xlane.xlu0 %128
    %v130 = vsel %vm105, %v47, 0.0
    %131 = vadd.xlane.f32.xlu0 %v130
    %v132 = vpop.xlane.xlu0 %131
    %v133 = vsel %vm105, %v48, 0.0
    %134 = vadd.xlane.f32.xlu0 %v133
    %v135 = vpop.xlane.xlu0 %134
    %v136 = vsel %vm105, %v49, 0.0
    %137 = vadd.xlane.f32.xlu0 %v136
    %v138 = vpop.xlane.xlu0 %137
    %v139 = vsel %vm105, %v50, 0.0
    %140 = vadd.xlane.f32.xlu0 %v139
    %v141 = vpop.xlane.xlu0 %140
    %v142 = vsel %vm105, %v51, 0.0
    %143 = vadd.xlane.f32.xlu0 %v142
    %v144 = vpop.xlane.xlu0 %143
    %v145 = vsel %vm105, %v52, 0.0
    %146 = vadd.xlane.f32.xlu0 %v145
    %v147 = vpop.xlane.xlu0 %146
    %v148 = vsel %vm105, %v53, 0.0
    %149 = vadd.xlane.f32.xlu0 %v148
    %v150 = vpop.xlane.xlu0 %149
    %v151 = vsel %vm105, %v54, 0.0
    %152 = vadd.xlane.f32.xlu0 %v151
    %v153 = vpop.xlane.xlu0 %152
    %v154 = vsel %vm105, %v55, 0.0
    %155 = vadd.xlane.f32.xlu0 %v154
    %v156 = vpop.xlane.xlu0 %155
    %v157 = vsel %vm105, %v56, 0.0
    %158 = vadd.xlane.f32.xlu0 %v157
    %v159 = vpop.xlane.xlu0 %158
    %v160 = vsel %vm105, %v57, 0.0
    %161 = vadd.xlane.f32.xlu0 %v160
    %v162 = vpop.xlane.xlu0 %161
    %v163 = vsel %vm105, %v58, 0.0
    %164 = vadd.xlane.f32.xlu0 %v163
    %v165 = vpop.xlane.xlu0 %164
    %v166 = vsel %vm105, %v59, 0.0
    %167 = vadd.xlane.f32.xlu0 %v166
    %v168 = vpop.xlane.xlu0 %167
    %v169 = vsel %vm105, %v60, 0.0
    %170 = vadd.xlane.f32.xlu0 %v169
    %v171 = vpop.xlane.xlu0 %170
    %v172 = vsel %vm105, %v61, 0.0
    %173 = vadd.xlane.f32.xlu0 %v172
    %v174 = vpop.xlane.xlu0 %173
    %v175 = vsel %vm105, %v62, 0.0
    %176 = vadd.xlane.f32.xlu0 %v175
    %v177 = vpop.xlane.xlu0 %176
    %v178 = vsel %vm105, %v63, 0.0
    %179 = vadd.xlane.f32.xlu0 %v178
    %v180 = vpop.xlane.xlu0 %179
    %v181 = vsel %vm105, %v64, 0.0
    %182 = vadd.xlane.f32.xlu0 %v181
    %v183 = vpop.xlane.xlu0 %182
    %v184 = vsel %vm105, %v65, 0.0
    %185 = vadd.xlane.f32.xlu0 %v184
    %v186 = vpop.xlane.xlu0 %185
    %v187 = vsel %vm105, %v66, 0.0
    %188 = vadd.xlane.f32.xlu0 %v187
    %v189 = vpop.xlane.xlu0 %188
    %v190 = vsel %vm105, %v67, 0.0
    %191 = vadd.xlane.f32.xlu0 %v190
    %v192 = vpop.xlane.xlu0 %191
    %v193 = vsel %vm105, %v68, 0.0
    %194 = vadd.xlane.f32.xlu0 %v193
    %v195 = vpop.xlane.xlu0 %194
    %v196 = vsel %vm105, %v69, 0.0
    %197 = vadd.xlane.f32.xlu0 %v196
    %v198 = vpop.xlane.xlu0 %197
    %v199 = vsel %vm105, %v70, 0.0
    %200 = vadd.xlane.f32.xlu0 %v199
    %v201 = vpop.xlane.xlu0 %200
    %v202 = vmul.f32 %v39, %v39
    %v203 = vmul.f32 %v40, %v40
    %v204 = vmul.f32 %v41, %v41
    %v205 = vmul.f32 %v42, %v42
    %v206 = vmul.f32 %v43, %v43
    %v207 = vmul.f32 %v44, %v44
    %v208 = vmul.f32 %v45, %v45
    %v209 = vmul.f32 %v46, %v46
    %v210 = vmul.f32 %v47, %v47
    %v211 = vmul.f32 %v48, %v48
    %v212 = vmul.f32 %v49, %v49
    %v213 = vmul.f32 %v50, %v50
    %v214 = vmul.f32 %v51, %v51
    %v215 = vmul.f32 %v52, %v52
    %v216 = vmul.f32 %v53, %v53
    %v217 = vmul.f32 %v54, %v54
    %v218 = vmul.f32 %v55, %v55
    %v219 = vmul.f32 %v56, %v56
    %v220 = vmul.f32 %v57, %v57
    %v221 = vmul.f32 %v58, %v58
    %v222 = vmul.f32 %v59, %v59
    %v223 = vmul.f32 %v60, %v60
    %v224 = vmul.f32 %v61, %v61
    %v225 = vmul.f32 %v62, %v62
    %v226 = vmul.f32 %v63, %v63
    %v227 = vmul.f32 %v64, %v64
    %v228 = vmul.f32 %v65, %v65
    %v229 = vmul.f32 %v66, %v66
    %v230 = vmul.f32 %v67, %v67
    %v231 = vmul.f32 %v68, %v68
    %v232 = vmul.f32 %v69, %v69
    %v233 = vmul.f32 %v70, %v70
    %v234 = vsel %vm105, %v202, 0.0
    %235 = vadd.xlane.f32.xlu0 %v234
    %v236 = vpop.xlane.xlu0 %235
    %v237 = vsel %vm105, %v203, 0.0
    %238 = vadd.xlane.f32.xlu0 %v237
    %v239 = vpop.xlane.xlu0 %238
    %v240 = vsel %vm105, %v204, 0.0
    %241 = vadd.xlane.f32.xlu0 %v240
    %v242 = vpop.xlane.xlu0 %241
    %v243 = vsel %vm105, %v205, 0.0
    %244 = vadd.xlane.f32.xlu0 %v243
    %v245 = vpop.xlane.xlu0 %244
    %v246 = vsel %vm105, %v206, 0.0
    %247 = vadd.xlane.f32.xlu0 %v246
    %v248 = vpop.xlane.xlu0 %247
    %v249 = vsel %vm105, %v207, 0.0
    %250 = vadd.xlane.f32.xlu0 %v249
    %v251 = vpop.xlane.xlu0 %250
    %v252 = vsel %vm105, %v208, 0.0
    %253 = vadd.xlane.f32.xlu0 %v252
    %v254 = vpop.xlane.xlu0 %253
    %v255 = vsel %vm105, %v209, 0.0
    %256 = vadd.xlane.f32.xlu0 %v255
    %v257 = vpop.xlane.xlu0 %256
    %v258 = vsel %vm105, %v210, 0.0
    %259 = vadd.xlane.f32.xlu0 %v258
    %v260 = vpop.xlane.xlu0 %259
    %v261 = vsel %vm105, %v211, 0.0
    %262 = vadd.xlane.f32.xlu0 %v261
    %v263 = vpop.xlane.xlu0 %262
    %v264 = vsel %vm105, %v212, 0.0
    %265 = vadd.xlane.f32.xlu0 %v264
    %v266 = vpop.xlane.xlu0 %265
    %v267 = vsel %vm105, %v213, 0.0
    %268 = vadd.xlane.f32.xlu0 %v267
    %v269 = vpop.xlane.xlu0 %268
    %v270 = vsel %vm105, %v214, 0.0
    %271 = vadd.xlane.f32.xlu0 %v270
    %v272 = vpop.xlane.xlu0 %271
    %v273 = vsel %vm105, %v215, 0.0
    %274 = vadd.xlane.f32.xlu0 %v273
    %v275 = vpop.xlane.xlu0 %274
    %v276 = vsel %vm105, %v216, 0.0
    %277 = vadd.xlane.f32.xlu0 %v276
    %v278 = vpop.xlane.xlu0 %277
    %v279 = vsel %vm105, %v217, 0.0
    %280 = vadd.xlane.f32.xlu0 %v279
    %v281 = vpop.xlane.xlu0 %280
    %v282 = vsel %vm105, %v218, 0.0
    %283 = vadd.xlane.f32.xlu0 %v282
    %v284 = vpop.xlane.xlu0 %283
    %v285 = vsel %vm105, %v219, 0.0
    %286 = vadd.xlane.f32.xlu0 %v285
    %v287 = vpop.xlane.xlu0 %286
    %v288 = vsel %vm105, %v220, 0.0
    %289 = vadd.xlane.f32.xlu0 %v288
    %v290 = vpop.xlane.xlu0 %289
    %v291 = vsel %vm105, %v221, 0.0
    %292 = vadd.xlane.f32.xlu0 %v291
    %v293 = vpop.xlane.xlu0 %292
    %v294 = vsel %vm105, %v222, 0.0
    %295 = vadd.xlane.f32.xlu0 %v294
    %v296 = vpop.xlane.xlu0 %295
    %v297 = vsel %vm105, %v223, 0.0
    %298 = vadd.xlane.f32.xlu0 %v297
    %v299 = vpop.xlane.xlu0 %298
    %v300 = vsel %vm105, %v224, 0.0
    %301 = vadd.xlane.f32.xlu0 %v300
    %v302 = vpop.xlane.xlu0 %301
    %v303 = vsel %vm105, %v225, 0.0
    %304 = vadd.xlane.f32.xlu0 %v303
    %v305 = vpop.xlane.xlu0 %304
    %v306 = vsel %vm105, %v226, 0.0
    %307 = vadd.xlane.f32.xlu0 %v306
    %v308 = vpop.xlane.xlu0 %307
    %v309 = vsel %vm105, %v227, 0.0
    %310 = vadd.xlane.f32.xlu0 %v309
    %v311 = vpop.xlane.xlu0 %310
    %v312 = vsel %vm105, %v228, 0.0
    %313 = vadd.xlane.f32.xlu0 %v312
    %v314 = vpop.xlane.xlu0 %313
    %v315 = vsel %vm105, %v229, 0.0
    %316 = vadd.xlane.f32.xlu0 %v315
    %v317 = vpop.xlane.xlu0 %316
    %v318 = vsel %vm105, %v230, 0.0
    %319 = vadd.xlane.f32.xlu0 %v318
    %v320 = vpop.xlane.xlu0 %319
    %v321 = vsel %vm105, %v231, 0.0
    %322 = vadd.xlane.f32.xlu0 %v321
    %v323 = vpop.xlane.xlu0 %322
    %v324 = vsel %vm105, %v232, 0.0
    %325 = vadd.xlane.f32.xlu0 %v324
    %v326 = vpop.xlane.xlu0 %325
    %v327 = vsel %vm105, %v233, 0.0
    %328 = vadd.xlane.f32.xlu0 %v327
    %v329 = vpop.xlane.xlu0 %328
    %v330 = vmul.f32 %v108, 0.0625
    %v331 = vmul.f32 %v111, 0.0625
    %v332 = vmul.f32 %v114, 0.0625
    %v333 = vmul.f32 %v117, 0.0625
    %v334 = vmul.f32 %v120, 0.0625
    %v335 = vmul.f32 %v123, 0.0625
    %v336 = vmul.f32 %v126, 0.0625
    %v337 = vmul.f32 %v129, 0.0625
    %v338 = vmul.f32 %v132, 0.0625
    %v339 = vmul.f32 %v135, 0.0625
    %v340 = vmul.f32 %v138, 0.0625
    %v341 = vmul.f32 %v141, 0.0625
    %v342 = vmul.f32 %v144, 0.0625
    %v343 = vmul.f32 %v147, 0.0625
    %v344 = vmul.f32 %v150, 0.0625
    %v345 = vmul.f32 %v153, 0.0625
    %v346 = vmul.f32 %v156, 0.0625
    %v347 = vmul.f32 %v159, 0.0625
    %v348 = vmul.f32 %v162, 0.0625
    %v349 = vmul.f32 %v165, 0.0625
    %v350 = vmul.f32 %v168, 0.0625
    %v351 = vmul.f32 %v171, 0.0625
    %v352 = vmul.f32 %v174, 0.0625
    %v353 = vmul.f32 %v177, 0.0625
    %v354 = vmul.f32 %v180, 0.0625
    %v355 = vmul.f32 %v183, 0.0625
    %v356 = vmul.f32 %v186, 0.0625
    %v357 = vmul.f32 %v189, 0.0625
    %v358 = vmul.f32 %v192, 0.0625
    %v359 = vmul.f32 %v195, 0.0625
    %v360 = vmul.f32 %v198, 0.0625
    %v361 = vmul.f32 %v201, 0.0625
    %v362 = vmul.f32 %v236, 0.0625
    %v363 = vmul.f32 %v239, 0.0625
    %v364 = vmul.f32 %v242, 0.0625
    %v365 = vmul.f32 %v245, 0.0625
    %v366 = vmul.f32 %v248, 0.0625
    %v367 = vmul.f32 %v251, 0.0625
    %v368 = vmul.f32 %v254, 0.0625
    %v369 = vmul.f32 %v257, 0.0625
    %v370 = vmul.f32 %v260, 0.0625
    %v371 = vmul.f32 %v263, 0.0625
    %v372 = vmul.f32 %v266, 0.0625
    %v373 = vmul.f32 %v269, 0.0625
    %v374 = vmul.f32 %v272, 0.0625
    %v375 = vmul.f32 %v275, 0.0625
    %v376 = vmul.f32 %v278, 0.0625
    %v377 = vmul.f32 %v281, 0.0625
    %v378 = vmul.f32 %v284, 0.0625
    %v379 = vmul.f32 %v287, 0.0625
    %v380 = vmul.f32 %v290, 0.0625
    %v381 = vmul.f32 %v293, 0.0625
    %v382 = vmul.f32 %v296, 0.0625
    %v383 = vmul.f32 %v299, 0.0625
    %v384 = vmul.f32 %v302, 0.0625
    %v385 = vmul.f32 %v305, 0.0625
    %v386 = vmul.f32 %v308, 0.0625
    %v387 = vmul.f32 %v311, 0.0625
    %v388 = vmul.f32 %v314, 0.0625
    %v389 = vmul.f32 %v317, 0.0625
    %v390 = vmul.f32 %v320, 0.0625
    %v391 = vmul.f32 %v323, 0.0625
    %v392 = vmul.f32 %v326, 0.0625
    %v393 = vmul.f32 %v329, 0.0625
    %v394 = vmul.f32 %v330, %v330
    %v395 = vmul.f32 %v331, %v331
    %v396 = vmul.f32 %v332, %v332
    %v397 = vmul.f32 %v333, %v333
    %v398 = vmul.f32 %v334, %v334
    %v399 = vmul.f32 %v335, %v335
    %v400 = vmul.f32 %v336, %v336
    %v401 = vmul.f32 %v337, %v337
    %v402 = vmul.f32 %v338, %v338
    %v403 = vmul.f32 %v339, %v339
    %v404 = vmul.f32 %v340, %v340
    %v405 = vmul.f32 %v341, %v341
    %v406 = vmul.f32 %v342, %v342
    %v407 = vmul.f32 %v343, %v343
    %v408 = vmul.f32 %v344, %v344
    %v409 = vmul.f32 %v345, %v345
    %v410 = vmul.f32 %v346, %v346
    %v411 = vmul.f32 %v347, %v347
    %v412 = vmul.f32 %v348, %v348
    %v413 = vmul.f32 %v349, %v349
    %v414 = vmul.f32 %v350, %v350
    %v415 = vmul.f32 %v351, %v351
    %v416 = vmul.f32 %v352, %v352
    %v417 = vmul.f32 %v353, %v353
    %v418 = vmul.f32 %v354, %v354
    %v419 = vmul.f32 %v355, %v355
    %v420 = vmul.f32 %v356, %v356
    %v421 = vmul.f32 %v357, %v357
    %v422 = vmul.f32 %v358, %v358
    %v423 = vmul.f32 %v359, %v359
    %v424 = vmul.f32 %v360, %v360
    %v425 = vmul.f32 %v361, %v361
    %v426 = vsub.f32 %v362, %v394
    %v427 = vsub.f32 %v363, %v395
    %v428 = vsub.f32 %v364, %v396
    %v429 = vsub.f32 %v365, %v397
    %v430 = vsub.f32 %v366, %v398
    %v431 = vsub.f32 %v367, %v399
    %v432 = vsub.f32 %v368, %v400
    %v433 = vsub.f32 %v369, %v401
    %v434 = vsub.f32 %v370, %v402
    %v435 = vsub.f32 %v371, %v403
    %v436 = vsub.f32 %v372, %v404
    %v437 = vsub.f32 %v373, %v405
    %v438 = vsub.f32 %v374, %v406
    %v439 = vsub.f32 %v375, %v407
    %v440 = vsub.f32 %v376, %v408
    %v441 = vsub.f32 %v377, %v409
    %v442 = vsub.f32 %v378, %v410
    %v443 = vsub.f32 %v379, %v411
    %v444 = vsub.f32 %v380, %v412
    %v445 = vsub.f32 %v381, %v413
    %v446 = vsub.f32 %v382, %v414
    %v447 = vsub.f32 %v383, %v415
    %v448 = vsub.f32 %v384, %v416
    %v449 = vsub.f32 %v385, %v417
    %v450 = vsub.f32 %v386, %v418
    %v451 = vsub.f32 %v387, %v419
    %v452 = vsub.f32 %v388, %v420
    %v453 = vsub.f32 %v389, %v421
    %v454 = vsub.f32 %v390, %v422
    %v455 = vsub.f32 %v391, %v423
    %v456 = vsub.f32 %v392, %v424
    %v457 = vsub.f32 %v393, %v425
    %v458 = vmax.f32 %v426, 0.0
    %v459 = vmax.f32 %v427, 0.0
    %v460 = vmax.f32 %v428, 0.0
    %v461 = vmax.f32 %v429, 0.0
    %v462 = vmax.f32 %v430, 0.0
    %v463 = vmax.f32 %v431, 0.0
    %v464 = vmax.f32 %v432, 0.0
    %v465 = vmax.f32 %v433, 0.0
    %v466 = vmax.f32 %v434, 0.0
    %v467 = vmax.f32 %v435, 0.0
    %v468 = vmax.f32 %v436, 0.0
    %v469 = vmax.f32 %v437, 0.0
    %v470 = vmax.f32 %v438, 0.0
    %v471 = vmax.f32 %v439, 0.0
    %v472 = vmax.f32 %v440, 0.0
    %v473 = vmax.f32 %v441, 0.0
    %v474 = vmax.f32 %v442, 0.0
    %v475 = vmax.f32 %v443, 0.0
    %v476 = vmax.f32 %v444, 0.0
    %v477 = vmax.f32 %v445, 0.0
    %v478 = vmax.f32 %v446, 0.0
    %v479 = vmax.f32 %v447, 0.0
    %v480 = vmax.f32 %v448, 0.0
    %v481 = vmax.f32 %v449, 0.0
    %v482 = vmax.f32 %v450, 0.0
    %v483 = vmax.f32 %v451, 0.0
    %v484 = vmax.f32 %v452, 0.0
    %v485 = vmax.f32 %v453, 0.0
    %v486 = vmax.f32 %v454, 0.0
    %v487 = vmax.f32 %v455, 0.0
    %v488 = vmax.f32 %v456, 0.0
    %v489 = vmax.f32 %v457, 0.0
    %v490 = vsub.f32 %v39, %v330
    %v491 = vsub.f32 %v40, %v331
    %v492 = vsub.f32 %v41, %v332
    %v493 = vsub.f32 %v42, %v333
    %v494 = vsub.f32 %v43, %v334
    %v495 = vsub.f32 %v44, %v335
    %v496 = vsub.f32 %v45, %v336
    %v497 = vsub.f32 %v46, %v337
    %v498 = vsub.f32 %v47, %v338
    %v499 = vsub.f32 %v48, %v339
    %v500 = vsub.f32 %v49, %v340
    %v501 = vsub.f32 %v50, %v341
    %v502 = vsub.f32 %v51, %v342
    %v503 = vsub.f32 %v52, %v343
    %v504 = vsub.f32 %v53, %v344
    %v505 = vsub.f32 %v54, %v345
    %v506 = vsub.f32 %v55, %v346
    %v507 = vsub.f32 %v56, %v347
    %v508 = vsub.f32 %v57, %v348
    %v509 = vsub.f32 %v58, %v349
    %v510 = vsub.f32 %v59, %v350
    %v511 = vsub.f32 %v60, %v351
    %v512 = vsub.f32 %v61, %v352
    %v513 = vsub.f32 %v62, %v353
    %v514 = vsub.f32 %v63, %v354
    %v515 = vsub.f32 %v64, %v355
    %v516 = vsub.f32 %v65, %v356
    %v517 = vsub.f32 %v66, %v357
    %v518 = vsub.f32 %v67, %v358
    %v519 = vsub.f32 %v68, %v359
    %v520 = vsub.f32 %v69, %v360
    %v521 = vsub.f32 %v70, %v361
    %v522 = vadd.f32 %v458, 1e-05
    %v523 = vadd.f32 %v459, 1e-05
    %v524 = vadd.f32 %v460, 1e-05
    %v525 = vadd.f32 %v461, 1e-05
    %v526 = vadd.f32 %v462, 1e-05
    %v527 = vadd.f32 %v463, 1e-05
    %v528 = vadd.f32 %v464, 1e-05
    %v529 = vadd.f32 %v465, 1e-05
    %v530 = vadd.f32 %v466, 1e-05
    %v531 = vadd.f32 %v467, 1e-05
    %v532 = vadd.f32 %v468, 1e-05
    %v533 = vadd.f32 %v469, 1e-05
    %v534 = vadd.f32 %v470, 1e-05
    %v535 = vadd.f32 %v471, 1e-05
    %v536 = vadd.f32 %v472, 1e-05
    %v537 = vadd.f32 %v473, 1e-05
    %v538 = vadd.f32 %v474, 1e-05
    %v539 = vadd.f32 %v475, 1e-05
    %v540 = vadd.f32 %v476, 1e-05
    %v541 = vadd.f32 %v477, 1e-05
    %v542 = vadd.f32 %v478, 1e-05
    %v543 = vadd.f32 %v479, 1e-05
    %v544 = vadd.f32 %v480, 1e-05
    %v545 = vadd.f32 %v481, 1e-05
    %v546 = vadd.f32 %v482, 1e-05
    %v547 = vadd.f32 %v483, 1e-05
    %v548 = vadd.f32 %v484, 1e-05
    %v549 = vadd.f32 %v485, 1e-05
    %v550 = vadd.f32 %v486, 1e-05
    %v551 = vadd.f32 %v487, 1e-05
    %v552 = vadd.f32 %v488, 1e-05
    %v553 = vadd.f32 %v489, 1e-05
    %v554 = vrsqrt.pop %v522
    %v555 = vrsqrt.pop %v523
    %v556 = vrsqrt.pop %v524
    %v557 = vrsqrt.pop %v525
    %v558 = vrsqrt.pop %v526
    %v559 = vrsqrt.pop %v527
    %v560 = vrsqrt.pop %v528
    %v561 = vrsqrt.pop %v529
    %v562 = vrsqrt.pop %v530
    %v563 = vrsqrt.pop %v531
    %v564 = vrsqrt.pop %v532
    %v565 = vrsqrt.pop %v533
    %v566 = vrsqrt.pop %v534
    %v567 = vrsqrt.pop %v535
    %v568 = vrsqrt.pop %v536
    %v569 = vrsqrt.pop %v537
    %v570 = vrsqrt.pop %v538
    %v571 = vrsqrt.pop %v539
    %v572 = vrsqrt.pop %v540
    %v573 = vrsqrt.pop %v541
    %v574 = vrsqrt.pop %v542
    %v575 = vrsqrt.pop %v543
    %v576 = vrsqrt.pop %v544
    %v577 = vrsqrt.pop %v545
    %v578 = vrsqrt.pop %v546
    %v579 = vrsqrt.pop %v547
    %v580 = vrsqrt.pop %v548
    %v581 = vrsqrt.pop %v549
    %v582 = vrsqrt.pop %v550
    %v583 = vrsqrt.pop %v551
    %v584 = vrsqrt.pop %v552
    %v585 = vrsqrt.pop %v553
    %v586 = vmul.f32 %v490, %v554
    %v587 = vmul.f32 %v491, %v555
    %v588 = vmul.f32 %v492, %v556
    %v589 = vmul.f32 %v493, %v557
    %v590 = vmul.f32 %v494, %v558
    %v591 = vmul.f32 %v495, %v559
    %v592 = vmul.f32 %v496, %v560
    %v593 = vmul.f32 %v497, %v561
    %v594 = vmul.f32 %v498, %v562
    %v595 = vmul.f32 %v499, %v563
    %v596 = vmul.f32 %v500, %v564
    %v597 = vmul.f32 %v501, %v565
    %v598 = vmul.f32 %v502, %v566
    %v599 = vmul.f32 %v503, %v567
    %v600 = vmul.f32 %v504, %v568
    %v601 = vmul.f32 %v505, %v569
    %v602 = vmul.f32 %v506, %v570
    %v603 = vmul.f32 %v507, %v571
    %v604 = vmul.f32 %v508, %v572
    %v605 = vmul.f32 %v509, %v573
    %v606 = vmul.f32 %v510, %v574
    %v607 = vmul.f32 %v511, %v575
    %v608 = vmul.f32 %v512, %v576
    %v609 = vmul.f32 %v513, %v577
    %v610 = vmul.f32 %v514, %v578
    %v611 = vmul.f32 %v515, %v579
    %v612 = vmul.f32 %v516, %v580
    %v613 = vmul.f32 %v517, %v581
    %v614 = vmul.f32 %v518, %v582
    %v615 = vmul.f32 %v519, %v583
    %v616 = vmul.f32 %v520, %v584
    %v617 = vmul.f32 %v521, %v585
    %v619 = vlaneseq
    %v620 = vshrl.u32 %v619, 7
    %v621 = vsub.s32 0, %v620
    %v622 = vrot.slane %v103, %v621
    %v624 = vmul.f32 %v586, %v622
    %v625 = vmul.f32 %v587, %v622
    %v626 = vmul.f32 %v588, %v622
    %v627 = vmul.f32 %v589, %v622
    %v628 = vmul.f32 %v590, %v622
    %v629 = vmul.f32 %v591, %v622
    %v630 = vmul.f32 %v592, %v622
    %v631 = vmul.f32 %v593, %v622
    %v632 = vmul.f32 %v594, %v622
    %v633 = vmul.f32 %v595, %v622
    %v634 = vmul.f32 %v596, %v622
    %v635 = vmul.f32 %v597, %v622
    %v636 = vmul.f32 %v598, %v622
    %v637 = vmul.f32 %v599, %v622
    %v638 = vmul.f32 %v600, %v622
    %v639 = vmul.f32 %v601, %v622
    %v640 = vmul.f32 %v602, %v622
    %v641 = vmul.f32 %v603, %v622
    %v642 = vmul.f32 %v604, %v622
    %v643 = vmul.f32 %v605, %v622
    %v644 = vmul.f32 %v606, %v622
    %v645 = vmul.f32 %v607, %v622
    %v646 = vmul.f32 %v608, %v622
    %v647 = vmul.f32 %v609, %v622
    %v648 = vmul.f32 %v610, %v622
    %v649 = vmul.f32 %v611, %v622
    %v650 = vmul.f32 %v612, %v622
    %v651 = vmul.f32 %v613, %v622
    %v652 = vmul.f32 %v614, %v622
    %v653 = vmul.f32 %v615, %v622
    %v654 = vmul.f32 %v616, %v622
    %v655 = vmul.f32 %v617, %v622
    %v657 = vlaneseq
    %v658 = vshrl.u32 %v657, 7
    %v659 = vsub.s32 0, %v658
    %v660 = vrot.slane %v104, %v659
    %v662 = vadd.f32 %v624, %v660
    %v663 = vadd.f32 %v625, %v660
    %v664 = vadd.f32 %v626, %v660
    %v665 = vadd.f32 %v627, %v660
    %v666 = vadd.f32 %v628, %v660
    %v667 = vadd.f32 %v629, %v660
    %v668 = vadd.f32 %v630, %v660
    %v669 = vadd.f32 %v631, %v660
    %v670 = vadd.f32 %v632, %v660
    %v671 = vadd.f32 %v633, %v660
    %v672 = vadd.f32 %v634, %v660
    %v673 = vadd.f32 %v635, %v660
    %v674 = vadd.f32 %v636, %v660
    %v675 = vadd.f32 %v637, %v660
    %v676 = vadd.f32 %v638, %v660
    %v677 = vadd.f32 %v639, %v660
    %v678 = vadd.f32 %v640, %v660
    %v679 = vadd.f32 %v641, %v660
    %v680 = vadd.f32 %v642, %v660
    %v681 = vadd.f32 %v643, %v660
    %v682 = vadd.f32 %v644, %v660
    %v683 = vadd.f32 %v645, %v660
    %v684 = vadd.f32 %v646, %v660
    %v685 = vadd.f32 %v647, %v660
    %v686 = vadd.f32 %v648, %v660
    %v687 = vadd.f32 %v649, %v660
    %v688 = vadd.f32 %v650, %v660
    %v689 = vadd.f32 %v651, %v660
    %v690 = vadd.f32 %v652, %v660
    %v691 = vadd.f32 %v653, %v660
    %v692 = vadd.f32 %v654, %v660
    %v693 = vadd.f32 %v655, %v660
    %v694 = vmul.f32 %v662, 0.02
    %v695 = vmul.f32 %v663, 0.02
    %v696 = vmul.f32 %v664, 0.02
    %v697 = vmul.f32 %v665, 0.02
    %v698 = vmul.f32 %v666, 0.02
    %v699 = vmul.f32 %v667, 0.02
    %v700 = vmul.f32 %v668, 0.02
    %v701 = vmul.f32 %v669, 0.02
    %v702 = vmul.f32 %v670, 0.02
    %v703 = vmul.f32 %v671, 0.02
    %v704 = vmul.f32 %v672, 0.02
    %v705 = vmul.f32 %v673, 0.02
    %v706 = vmul.f32 %v674, 0.02
    %v707 = vmul.f32 %v675, 0.02
    %v708 = vmul.f32 %v676, 0.02
    %v709 = vmul.f32 %v677, 0.02
    %v710 = vmul.f32 %v678, 0.02
    %v711 = vmul.f32 %v679, 0.02
    %v712 = vmul.f32 %v680, 0.02
    %v713 = vmul.f32 %v681, 0.02
    %v714 = vmul.f32 %v682, 0.02
    %v715 = vmul.f32 %v683, 0.02
    %v716 = vmul.f32 %v684, 0.02
    %v717 = vmul.f32 %v685, 0.02
    %v718 = vmul.f32 %v686, 0.02
    %v719 = vmul.f32 %v687, 0.02
    %v720 = vmul.f32 %v688, 0.02
    %v721 = vmul.f32 %v689, 0.02
    %v722 = vmul.f32 %v690, 0.02
    %v723 = vmul.f32 %v691, 0.02
    %v724 = vmul.f32 %v692, 0.02
    %v725 = vmul.f32 %v693, 0.02
    %v726 = vmax.f32 %v662, %v694
    %v727 = vmax.f32 %v663, %v695
    %v728 = vmax.f32 %v664, %v696
    %v729 = vmax.f32 %v665, %v697
    %v730 = vmax.f32 %v666, %v698
    %v731 = vmax.f32 %v667, %v699
    %v732 = vmax.f32 %v668, %v700
    %v733 = vmax.f32 %v669, %v701
    %v734 = vmax.f32 %v670, %v702
    %v735 = vmax.f32 %v671, %v703
    %v736 = vmax.f32 %v672, %v704
    %v737 = vmax.f32 %v673, %v705
    %v738 = vmax.f32 %v674, %v706
    %v739 = vmax.f32 %v675, %v707
    %v740 = vmax.f32 %v676, %v708
    %v741 = vmax.f32 %v677, %v709
    %v742 = vmax.f32 %v678, %v710
    %v743 = vmax.f32 %v679, %v711
    %v744 = vmax.f32 %v680, %v712
    %v745 = vmax.f32 %v681, %v713
    %v746 = vmax.f32 %v682, %v714
    %v747 = vmax.f32 %v683, %v715
    %v748 = vmax.f32 %v684, %v716
    %v749 = vmax.f32 %v685, %v717
    %v750 = vmax.f32 %v686, %v718
    %v751 = vmax.f32 %v687, %v719
    %v752 = vmax.f32 %v688, %v720
    %v753 = vmax.f32 %v689, %v721
    %v754 = vmax.f32 %v690, %v722
    %v755 = vmax.f32 %v691, %v723
    %v756 = vmax.f32 %v692, %v724
    %v757 = vmax.f32 %v693, %v725
    %v758 = vld [vmem:[%s6] sm:$0xff]
    %v759 = vld [vmem:[%s6 + $0x8] sm:$0xff]
    %v760 = vld [vmem:[%s7] sm:$0xff]
    %vm761 = vcmask 64512
    %v763 = vsel %vm761, %v71, 0
    %v766 = vsel %vm761, %v72, 0
    %v769 = vsel %vm761, %v73, 0
    %v772 = vsel %vm761, %v74, 0
    %v775 = vsel %vm761, %v75, 0
    %v778 = vsel %vm761, %v76, 0
    %v781 = vsel %vm761, %v77, 0
    %v784 = vsel %vm761, %v78, 0
    %v787 = vsel %vm761, %v79, 0
    %v790 = vsel %vm761, %v80, 0
    %v793 = vsel %vm761, %v81, 0
    %v796 = vsel %vm761, %v82, 0
    %v799 = vsel %vm761, %v83, 0
    %v802 = vsel %vm761, %v84, 0
    %v805 = vsel %vm761, %v85, 0
    %v808 = vsel %vm761, %v86, 0
    %v811 = vsel %vm761, %v87, 0
    %v814 = vsel %vm761, %v88, 0
    %v817 = vsel %vm761, %v89, 0
    %v820 = vsel %vm761, %v90, 0
    %v823 = vsel %vm761, %v91, 0
    %v826 = vsel %vm761, %v92, 0
    %v829 = vsel %vm761, %v93, 0
    %v832 = vsel %vm761, %v94, 0
    %v835 = vsel %vm761, %v95, 0
    %v838 = vsel %vm761, %v96, 0
    %v841 = vsel %vm761, %v97, 0
    %v844 = vsel %vm761, %v98, 0
    %v847 = vsel %vm761, %v99, 0
    %v850 = vsel %vm761, %v100, 0
    %v853 = vsel %vm761, %v101, 0
    %v856 = vsel %vm761, %v102, 0
    %858 = vmatprep.subr.mxu0 0.0
    %859 = vmatpush1.msra.mxu0 %v760
    %860 = vmatprep.subr.mxu0 0.0
    %861 = vmatpush1.msra.mxu0 0.0
    %862 = vmatprep.subr.mxu0 0.0
    %863 = vmatpush1.msra.mxu0 0.0
    %864 = vmatprep.subr.mxu0 0.0
    %865 = vmatpush1.msra.mxu0 0.0
    %866 = vmatprep.subr.mxu0 0.0
    %867 = vmatpush1.msra.mxu0 0.0
    %868 = vmatprep.subr.mxu0 0.0
    %869 = vmatpush1.msra.mxu0 0.0
    %870 = vmatprep.subr.mxu0 0.0
    %871 = vmatpush1.msra.mxu0 0.0
    %872 = vmatprep.subr.mxu0 0.0
    %873 = vmatpush1.msra.mxu0 0.0
    %874 = vmatprep.subr.mxu0 0.0
    %875 = vmatpush1.msra.mxu0 0.0
    %876 = vmatprep.subr.mxu0 0.0
    %877 = vmatpush1.msra.mxu0 0.0
    %878 = vmatprep.subr.mxu0 0.0
    %879 = vmatpush1.msra.mxu0 0.0
    %880 = vmatprep.subr.mxu0 0.0
    %881 = vmatpush1.msra.mxu0 0.0
    %882 = vmatprep.subr.mxu0 0.0
    %883 = vmatpush1.msra.mxu0 0.0
    %884 = vmatprep.subr.mxu0 0.0
    %885 = vmatpush1.msra.mxu0 0.0
    %886 = vmatprep.subr.mxu0 0.0
    %887 = vmatpush1.msra.mxu0 0.0
    %888 = vmatprep.subr.mxu0 0.0
    %889 = vmatpush1.msra.mxu0 0.0
    %890 = vmatprep.subr.mxu0 0.0
    %891 = vmatpush1.msra.mxu0 0.0
    %892 = vmatprep.subr.mxu0 0.0
    %893 = vmatpush1.msra.mxu0 0.0
    %894 = vmatprep.subr.mxu0 0.0
    %895 = vmatpush1.msra.mxu0 0.0
    %896 = vmatprep.subr.mxu0 0.0
    %897 = vmatpush1.msra.mxu0 0.0
    %898 = vmatprep.subr.mxu0 0.0
    %899 = vmatpush1.msra.mxu0 0.0
    %900 = vmatprep.subr.mxu0 0.0
    %901 = vmatpush1.msra.mxu0 0.0
    %902 = vmatprep.subr.mxu0 0.0
    %903 = vmatpush1.msra.mxu0 0.0
    %904 = vmatprep.subr.mxu0 0.0
    %905 = vmatpush1.msra.mxu0 0.0
    %906 = vmatprep.subr.mxu0 0.0
    %907 = vmatpush1.msra.mxu0 0.0
    %908 = vmatprep.subr.mxu0 0.0
    %909 = vmatpush1.msra.mxu0 0.0
    %910 = vmatprep.subr.mxu0 0.0
    %911 = vmatpush1.msra.mxu0 0.0
    %912 = vmatprep.subr.mxu0 0.0
    %913 = vmatpush1.msra.mxu0 0.0
    %914 = vmatprep.subr.mxu0 0.0
    %915 = vmatpush1.msra.mxu0 0.0
    %916 = vmatprep.subr.mxu0 0.0
    %917 = vmatpush1.msra.mxu0 0.0
    %918 = vmatprep.subr.mxu0 0.0
    %919 = vmatpush1.msra.mxu0 0.0
    %920 = vmatprep.subr.mxu0 0.0
    %921 = vmatpush1.msra.mxu0 0.0
    %922 = vmatprep.mubr.f32.mxu0 0.0
    %923 = vmatmul.mubr.f32.gmra.mrb[0].mxu0 %v763
    %v924 = vpop.f32.mrb[0].mxu0
    %v925 = vadd.f32 0.0, %v924
    %v926 = vpop.f32.mrb[0].mxu0
    %927 = vmatprep.mubr.f32.mxu0 0.0
    %928 = vmatmul.mubr.f32.gmra.mrb[0].mxu0 %v766
    %v929 = vpop.f32.mrb[0].mxu0
    %v930 = vadd.f32 0.0, %v929
    %v931 = vpop.f32.mrb[0].mxu0
    %932 = vmatprep.mubr.f32.mxu0 0.0
    %933 = vmatmul.mubr.f32.gmra.mrb[0].mxu0 %v769
    %v934 = vpop.f32.mrb[0].mxu0
    %v935 = vadd.f32 0.0, %v934
    %v936 = vpop.f32.mrb[0].mxu0
    %937 = vmatprep.mubr.f32.mxu0 0.0
    %938 = vmatmul.mubr.f32.gmra.mrb[0].mxu0 %v772
    %v939 = vpop.f32.mrb[0].mxu0
    %v940 = vadd.f32 0.0, %v939
    %v941 = vpop.f32.mrb[0].mxu0
    %942 = vmatprep.mubr.f32.mxu0 0.0
    %943 = vmatmul.mubr.f32.gmra.mrb[0].mxu0 %v775
    %v944 = vpop.f32.mrb[0].mxu0
    %v945 = vadd.f32 0.0, %v944
    %v946 = vpop.f32.mrb[0].mxu0
    %947 = vmatprep.mubr.f32.mxu0 0.0
    %948 = vmatmul.mubr.f32.gmra.mrb[0].mxu0 %v778
    %v949 = vpop.f32.mrb[0].mxu0
    %v950 = vadd.f32 0.0, %v949
    %v951 = vpop.f32.mrb[0].mxu0
    %952 = vmatprep.mubr.f32.mxu0 0.0
    %953 = vmatmul.mubr.f32.gmra.mrb[0].mxu0 %v781
    %v954 = vpop.f32.mrb[0].mxu0
    %v955 = vadd.f32 0.0, %v954
    %v956 = vpop.f32.mrb[0].mxu0
    %957 = vmatprep.mubr.f32.mxu0 0.0
    %958 = vmatmul.mubr.f32.gmra.mrb[0].mxu0 %v784
    %v959 = vpop.f32.mrb[0].mxu0
    %v960 = vadd.f32 0.0, %v959
    %v961 = vpop.f32.mrb[0].mxu0
    %962 = vmatprep.mubr.f32.mxu0 0.0
    %963 = vmatmul.mubr.f32.gmra.mrb[0].mxu0 %v787
    %v964 = vpop.f32.mrb[0].mxu0
    %v965 = vadd.f32 0.0, %v964
    %v966 = vpop.f32.mrb[0].mxu0
    %967 = vmatprep.mubr.f32.mxu0 0.0
    %968 = vmatmul.mubr.f32.gmra.mrb[0].mxu0 %v790
    %v969 = vpop.f32.mrb[0].mxu0
    %v970 = vadd.f32 0.0, %v969
    %v971 = vpop.f32.mrb[0].mxu0
    %972 = vmatprep.mubr.f32.mxu0 0.0
    %973 = vmatmul.mubr.f32.gmra.mrb[0].mxu0 %v793
    %v974 = vpop.f32.mrb[0].mxu0
    %v975 = vadd.f32 0.0, %v974
    %v976 = vpop.f32.mrb[0].mxu0
    %977 = vmatprep.mubr.f32.mxu0 0.0
    %978 = vmatmul.mubr.f32.gmra.mrb[0].mxu0 %v796
    %v979 = vpop.f32.mrb[0].mxu0
    %v980 = vadd.f32 0.0, %v979
    %v981 = vpop.f32.mrb[0].mxu0
    %982 = vmatprep.mubr.f32.mxu0 0.0
    %983 = vmatmul.mubr.f32.gmra.mrb[0].mxu0 %v799
    %v984 = vpop.f32.mrb[0].mxu0
    %v985 = vadd.f32 0.0, %v984
    %v986 = vpop.f32.mrb[0].mxu0
    %987 = vmatprep.mubr.f32.mxu0 0.0
    %988 = vmatmul.mubr.f32.gmra.mrb[0].mxu0 %v802
    %v989 = vpop.f32.mrb[0].mxu0
    %v990 = vadd.f32 0.0, %v989
    %v991 = vpop.f32.mrb[0].mxu0
    %992 = vmatprep.mubr.f32.mxu0 0.0
    %993 = vmatmul.mubr.f32.gmra.mrb[0].mxu0 %v805
    %v994 = vpop.f32.mrb[0].mxu0
    %v995 = vadd.f32 0.0, %v994
    %v996 = vpop.f32.mrb[0].mxu0
    %997 = vmatprep.mubr.f32.mxu0 0.0
    %998 = vmatmul.mubr.f32.gmra.mrb[0].mxu0 %v808
    %v999 = vpop.f32.mrb[0].mxu0
    %v1000 = vadd.f32 0.0, %v999
    %v1001 = vpop.f32.mrb[0].mxu0
    %1002 = vmatprep.mubr.f32.mxu0 0.0
    %1003 = vmatmul.mubr.f32.gmra.mrb[0].mxu0 %v811
    %v1004 = vpop.f32.mrb[0].mxu0
    %v1005 = vadd.f32 0.0, %v1004
    %v1006 = vpop.f32.mrb[0].mxu0
    %1007 = vmatprep.mubr.f32.mxu0 0.0
    %1008 = vmatmul.mubr.f32.gmra.mrb[0].mxu0 %v814
    %v1009 = vpop.f32.mrb[0].mxu0
    %v1010 = vadd.f32 0.0, %v1009
    %v1011 = vpop.f32.mrb[0].mxu0
    %1012 = vmatprep.mubr.f32.mxu0 0.0
    %1013 = vmatmul.mubr.f32.gmra.mrb[0].mxu0 %v817
    %v1014 = vpop.f32.mrb[0].mxu0
    %v1015 = vadd.f32 0.0, %v1014
    %v1016 = vpop.f32.mrb[0].mxu0
    %1017 = vmatprep.mubr.f32.mxu0 0.0
    %1018 = vmatmul.mubr.f32.gmra.mrb[0].mxu0 %v820
    %v1019 = vpop.f32.mrb[0].mxu0
    %v1020 = vadd.f32 0.0, %v1019
    %v1021 = vpop.f32.mrb[0].mxu0
    %1022 = vmatprep.mubr.f32.mxu0 0.0
    %1023 = vmatmul.mubr.f32.gmra.mrb[0].mxu0 %v823
    %v1024 = vpop.f32.mrb[0].mxu0
    %v1025 = vadd.f32 0.0, %v1024
    %v1026 = vpop.f32.mrb[0].mxu0
    %1027 = vmatprep.mubr.f32.mxu0 0.0
    %1028 = vmatmul.mubr.f32.gmra.mrb[0].mxu0 %v826
    %v1029 = vpop.f32.mrb[0].mxu0
    %v1030 = vadd.f32 0.0, %v1029
    %v1031 = vpop.f32.mrb[0].mxu0
    %1032 = vmatprep.mubr.f32.mxu0 0.0
    %1033 = vmatmul.mubr.f32.gmra.mrb[0].mxu0 %v829
    %v1034 = vpop.f32.mrb[0].mxu0
    %v1035 = vadd.f32 0.0, %v1034
    %v1036 = vpop.f32.mrb[0].mxu0
    %1037 = vmatprep.mubr.f32.mxu0 0.0
    %1038 = vmatmul.mubr.f32.gmra.mrb[0].mxu0 %v832
    %v1039 = vpop.f32.mrb[0].mxu0
    %v1040 = vadd.f32 0.0, %v1039
    %v1041 = vpop.f32.mrb[0].mxu0
    %1042 = vmatprep.mubr.f32.mxu0 0.0
    %1043 = vmatmul.mubr.f32.gmra.mrb[0].mxu0 %v835
    %v1044 = vpop.f32.mrb[0].mxu0
    %v1045 = vadd.f32 0.0, %v1044
    %v1046 = vpop.f32.mrb[0].mxu0
    %1047 = vmatprep.mubr.f32.mxu0 0.0
    %1048 = vmatmul.mubr.f32.gmra.mrb[0].mxu0 %v838
    %v1049 = vpop.f32.mrb[0].mxu0
    %v1050 = vadd.f32 0.0, %v1049
    %v1051 = vpop.f32.mrb[0].mxu0
    %1052 = vmatprep.mubr.f32.mxu0 0.0
    %1053 = vmatmul.mubr.f32.gmra.mrb[0].mxu0 %v841
    %v1054 = vpop.f32.mrb[0].mxu0
    %v1055 = vadd.f32 0.0, %v1054
    %v1056 = vpop.f32.mrb[0].mxu0
    %1057 = vmatprep.mubr.f32.mxu0 0.0
    %1058 = vmatmul.mubr.f32.gmra.mrb[0].mxu0 %v844
    %v1059 = vpop.f32.mrb[0].mxu0
    %v1060 = vadd.f32 0.0, %v1059
    %v1061 = vpop.f32.mrb[0].mxu0
    %1062 = vmatprep.mubr.f32.mxu0 0.0
    %1063 = vmatmul.mubr.f32.gmra.mrb[0].mxu0 %v847
    %v1064 = vpop.f32.mrb[0].mxu0
    %v1065 = vadd.f32 0.0, %v1064
    %v1066 = vpop.f32.mrb[0].mxu0
    %1067 = vmatprep.mubr.f32.mxu0 0.0
    %1068 = vmatmul.mubr.f32.gmra.mrb[0].mxu0 %v850
    %v1069 = vpop.f32.mrb[0].mxu0
    %v1070 = vadd.f32 0.0, %v1069
    %v1071 = vpop.f32.mrb[0].mxu0
    %1072 = vmatprep.mubr.f32.mxu0 0.0
    %1073 = vmatmul.mubr.f32.gmra.mrb[0].mxu0 %v853
    %v1074 = vpop.f32.mrb[0].mxu0
    %v1075 = vadd.f32 0.0, %v1074
    %v1076 = vpop.f32.mrb[0].mxu0
    %1077 = vmatprep.mubr.f32.mxu0 0.0
    %1078 = vmatmul.mubr.f32.gmra.mrb[0].mxu0 %v856
    %v1079 = vpop.f32.mrb[0].mxu0
    %v1080 = vadd.f32 0.0, %v1079
    %v1081 = vpop.f32.mrb[0].mxu0
    %1082 = vdwg.mxu0
    %v1084 = vsel %vm105, %v726, 0
    %v1087 = vsel %vm105, %v727, 0
    %v1090 = vsel %vm105, %v728, 0
    %v1093 = vsel %vm105, %v729, 0
    %v1096 = vsel %vm105, %v730, 0
    %v1099 = vsel %vm105, %v731, 0
    %v1102 = vsel %vm105, %v732, 0
    %v1105 = vsel %vm105, %v733, 0
    %v1108 = vsel %vm105, %v734, 0
    %v1111 = vsel %vm105, %v735, 0
    %v1114 = vsel %vm105, %v736, 0
    %v1117 = vsel %vm105, %v737, 0
    %v1120 = vsel %vm105, %v738, 0
    %v1123 = vsel %vm105, %v739, 0
    %v1126 = vsel %vm105, %v740, 0
    %v1129 = vsel %vm105, %v741, 0
    %v1132 = vsel %vm105, %v742, 0
    %v1135 = vsel %vm105, %v743, 0
    %v1138 = vsel %vm105, %v744, 0
    %v1141 = vsel %vm105, %v745, 0
    %v1144 = vsel %vm105, %v746, 0
    %v1147 = vsel %vm105, %v747, 0
    %v1150 = vsel %vm105, %v748, 0
    %v1153 = vsel %vm105, %v749, 0
    %v1156 = vsel %vm105, %v750, 0
    %v1159 = vsel %vm105, %v751, 0
    %v1162 = vsel %vm105, %v752, 0
    %v1165 = vsel %vm105, %v753, 0
    %v1168 = vsel %vm105, %v754, 0
    %v1171 = vsel %vm105, %v755, 0
    %v1174 = vsel %vm105, %v756, 0
    %v1177 = vsel %vm105, %v757, 0
    %1179 = vmatprep.subr.mxu0 0.0
    %1180 = vmatpush1.msra.mxu0 %v758
    %1181 = vmatprep.subr.mxu0 0.0
    %1182 = vmatpush1.msra.mxu0 %v759
    %1183 = vmatprep.subr.mxu0 0.0
    %1184 = vmatpush1.msra.mxu0 0.0
    %1185 = vmatprep.subr.mxu0 0.0
    %1186 = vmatpush1.msra.mxu0 0.0
    %1187 = vmatprep.subr.mxu0 0.0
    %1188 = vmatpush1.msra.mxu0 0.0
    %1189 = vmatprep.subr.mxu0 0.0
    %1190 = vmatpush1.msra.mxu0 0.0
    %1191 = vmatprep.subr.mxu0 0.0
    %1192 = vmatpush1.msra.mxu0 0.0
    %1193 = vmatprep.subr.mxu0 0.0
    %1194 = vmatpush1.msra.mxu0 0.0
    %1195 = vmatprep.subr.mxu0 0.0
    %1196 = vmatpush1.msra.mxu0 0.0
    %1197 = vmatprep.subr.mxu0 0.0
    %1198 = vmatpush1.msra.mxu0 0.0
    %1199 = vmatprep.subr.mxu0 0.0
    %1200 = vmatpush1.msra.mxu0 0.0
    %1201 = vmatprep.subr.mxu0 0.0
    %1202 = vmatpush1.msra.mxu0 0.0
    %1203 = vmatprep.subr.mxu0 0.0
    %1204 = vmatpush1.msra.mxu0 0.0
    %1205 = vmatprep.subr.mxu0 0.0
    %1206 = vmatpush1.msra.mxu0 0.0
    %1207 = vmatprep.subr.mxu0 0.0
    %1208 = vmatpush1.msra.mxu0 0.0
    %1209 = vmatprep.subr.mxu0 0.0
    %1210 = vmatpush1.msra.mxu0 0.0
    %1211 = vmatprep.subr.mxu0 0.0
    %1212 = vmatpush1.msra.mxu0 0.0
    %1213 = vmatprep.subr.mxu0 0.0
    %1214 = vmatpush1.msra.mxu0 0.0
    %1215 = vmatprep.subr.mxu0 0.0
    %1216 = vmatpush1.msra.mxu0 0.0
    %1217 = vmatprep.subr.mxu0 0.0
    %1218 = vmatpush1.msra.mxu0 0.0
    %1219 = vmatprep.subr.mxu0 0.0
    %1220 = vmatpush1.msra.mxu0 0.0
    %1221 = vmatprep.subr.mxu0 0.0
    %1222 = vmatpush1.msra.mxu0 0.0
    %1223 = vmatprep.subr.mxu0 0.0
    %1224 = vmatpush1.msra.mxu0 0.0
    %1225 = vmatprep.subr.mxu0 0.0
    %1226 = vmatpush1.msra.mxu0 0.0
    %1227 = vmatprep.subr.mxu0 0.0
    %1228 = vmatpush1.msra.mxu0 0.0
    %1229 = vmatprep.subr.mxu0 0.0
    %1230 = vmatpush1.msra.mxu0 0.0
    %1231 = vmatprep.subr.mxu0 0.0
    %1232 = vmatpush1.msra.mxu0 0.0
    %1233 = vmatprep.subr.mxu0 0.0
    %1234 = vmatpush1.msra.mxu0 0.0
    %1235 = vmatprep.subr.mxu0 0.0
    %1236 = vmatpush1.msra.mxu0 0.0
    %1237 = vmatprep.subr.mxu0 0.0
    %1238 = vmatpush1.msra.mxu0 0.0
    %1239 = vmatprep.subr.mxu0 0.0
    %1240 = vmatpush1.msra.mxu0 0.0
    %1241 = vmatprep.subr.mxu0 0.0
    %1242 = vmatpush1.msra.mxu0 0.0
    %1243 = vmatprep.mubr.f32.mxu0 0.0
    %1244 = vmatmul.mubr.f32.gmra.mrb[0].mxu0 %v1084
    %v1245 = vpop.f32.mrb[0].mxu0
    %v1246 = vadd.f32 %v925, %v1245
    %v1247 = vpop.f32.mrb[0].mxu0
    %1248 = vmatprep.mubr.f32.mxu0 0.0
    %1249 = vmatmul.mubr.f32.gmra.mrb[0].mxu0 %v1087
    %v1250 = vpop.f32.mrb[0].mxu0
    %v1251 = vadd.f32 %v930, %v1250
    %v1252 = vpop.f32.mrb[0].mxu0
    %1253 = vmatprep.mubr.f32.mxu0 0.0
    %1254 = vmatmul.mubr.f32.gmra.mrb[0].mxu0 %v1090
    %v1255 = vpop.f32.mrb[0].mxu0
    %v1256 = vadd.f32 %v935, %v1255
    %v1257 = vpop.f32.mrb[0].mxu0
    %1258 = vmatprep.mubr.f32.mxu0 0.0
    %1259 = vmatmul.mubr.f32.gmra.mrb[0].mxu0 %v1093
    %v1260 = vpop.f32.mrb[0].mxu0
    %v1261 = vadd.f32 %v940, %v1260
    %v1262 = vpop.f32.mrb[0].mxu0
    %1263 = vmatprep.mubr.f32.mxu0 0.0
    %1264 = vmatmul.mubr.f32.gmra.mrb[0].mxu0 %v1096
    %v1265 = vpop.f32.mrb[0].mxu0
    %v1266 = vadd.f32 %v945, %v1265
    %v1267 = vpop.f32.mrb[0].mxu0
    %1268 = vmatprep.mubr.f32.mxu0 0.0
    %1269 = vmatmul.mubr.f32.gmra.mrb[0].mxu0 %v1099
    %v1270 = vpop.f32.mrb[0].mxu0
    %v1271 = vadd.f32 %v950, %v1270
    %v1272 = vpop.f32.mrb[0].mxu0
    %1273 = vmatprep.mubr.f32.mxu0 0.0
    %1274 = vmatmul.mubr.f32.gmra.mrb[0].mxu0 %v1102
    %v1275 = vpop.f32.mrb[0].mxu0
    %v1276 = vadd.f32 %v955, %v1275
    %v1277 = vpop.f32.mrb[0].mxu0
    %1278 = vmatprep.mubr.f32.mxu0 0.0
    %1279 = vmatmul.mubr.f32.gmra.mrb[0].mxu0 %v1105
    %v1280 = vpop.f32.mrb[0].mxu0
    %v1281 = vadd.f32 %v960, %v1280
    %v1282 = vpop.f32.mrb[0].mxu0
    %1283 = vmatprep.mubr.f32.mxu0 0.0
    %1284 = vmatmul.mubr.f32.gmra.mrb[0].mxu0 %v1108
    %v1285 = vpop.f32.mrb[0].mxu0
    %v1286 = vadd.f32 %v965, %v1285
    %v1287 = vpop.f32.mrb[0].mxu0
    %1288 = vmatprep.mubr.f32.mxu0 0.0
    %1289 = vmatmul.mubr.f32.gmra.mrb[0].mxu0 %v1111
    %v1290 = vpop.f32.mrb[0].mxu0
    %v1291 = vadd.f32 %v970, %v1290
    %v1292 = vpop.f32.mrb[0].mxu0
    %1293 = vmatprep.mubr.f32.mxu0 0.0
    %1294 = vmatmul.mubr.f32.gmra.mrb[0].mxu0 %v1114
    %v1295 = vpop.f32.mrb[0].mxu0
    %v1296 = vadd.f32 %v975, %v1295
    %v1297 = vpop.f32.mrb[0].mxu0
    %1298 = vmatprep.mubr.f32.mxu0 0.0
    %1299 = vmatmul.mubr.f32.gmra.mrb[0].mxu0 %v1117
    %v1300 = vpop.f32.mrb[0].mxu0
    %v1301 = vadd.f32 %v980, %v1300
    %v1302 = vpop.f32.mrb[0].mxu0
    %1303 = vmatprep.mubr.f32.mxu0 0.0
    %1304 = vmatmul.mubr.f32.gmra.mrb[0].mxu0 %v1120
    %v1305 = vpop.f32.mrb[0].mxu0
    %v1306 = vadd.f32 %v985, %v1305
    %v1307 = vpop.f32.mrb[0].mxu0
    %1308 = vmatprep.mubr.f32.mxu0 0.0
    %1309 = vmatmul.mubr.f32.gmra.mrb[0].mxu0 %v1123
    %v1310 = vpop.f32.mrb[0].mxu0
    %v1311 = vadd.f32 %v990, %v1310
    %v1312 = vpop.f32.mrb[0].mxu0
    %1313 = vmatprep.mubr.f32.mxu0 0.0
    %1314 = vmatmul.mubr.f32.gmra.mrb[0].mxu0 %v1126
    %v1315 = vpop.f32.mrb[0].mxu0
    %v1316 = vadd.f32 %v995, %v1315
    %v1317 = vpop.f32.mrb[0].mxu0
    %1318 = vmatprep.mubr.f32.mxu0 0.0
    %1319 = vmatmul.mubr.f32.gmra.mrb[0].mxu0 %v1129
    %v1320 = vpop.f32.mrb[0].mxu0
    %v1321 = vadd.f32 %v1000, %v1320
    %v1322 = vpop.f32.mrb[0].mxu0
    %1323 = vmatprep.mubr.f32.mxu0 0.0
    %1324 = vmatmul.mubr.f32.gmra.mrb[0].mxu0 %v1132
    %v1325 = vpop.f32.mrb[0].mxu0
    %v1326 = vadd.f32 %v1005, %v1325
    %v1327 = vpop.f32.mrb[0].mxu0
    %1328 = vmatprep.mubr.f32.mxu0 0.0
    %1329 = vmatmul.mubr.f32.gmra.mrb[0].mxu0 %v1135
    %v1330 = vpop.f32.mrb[0].mxu0
    %v1331 = vadd.f32 %v1010, %v1330
    %v1332 = vpop.f32.mrb[0].mxu0
    %1333 = vmatprep.mubr.f32.mxu0 0.0
    %1334 = vmatmul.mubr.f32.gmra.mrb[0].mxu0 %v1138
    %v1335 = vpop.f32.mrb[0].mxu0
    %v1336 = vadd.f32 %v1015, %v1335
    %v1337 = vpop.f32.mrb[0].mxu0
    %1338 = vmatprep.mubr.f32.mxu0 0.0
    %1339 = vmatmul.mubr.f32.gmra.mrb[0].mxu0 %v1141
    %v1340 = vpop.f32.mrb[0].mxu0
    %v1341 = vadd.f32 %v1020, %v1340
    %v1342 = vpop.f32.mrb[0].mxu0
    %1343 = vmatprep.mubr.f32.mxu0 0.0
    %1344 = vmatmul.mubr.f32.gmra.mrb[0].mxu0 %v1144
    %v1345 = vpop.f32.mrb[0].mxu0
    %v1346 = vadd.f32 %v1025, %v1345
    %v1347 = vpop.f32.mrb[0].mxu0
    %1348 = vmatprep.mubr.f32.mxu0 0.0
    %1349 = vmatmul.mubr.f32.gmra.mrb[0].mxu0 %v1147
    %v1350 = vpop.f32.mrb[0].mxu0
    %v1351 = vadd.f32 %v1030, %v1350
    %v1352 = vpop.f32.mrb[0].mxu0
    %1353 = vmatprep.mubr.f32.mxu0 0.0
    %1354 = vmatmul.mubr.f32.gmra.mrb[0].mxu0 %v1150
    %v1355 = vpop.f32.mrb[0].mxu0
    %v1356 = vadd.f32 %v1035, %v1355
    %v1357 = vpop.f32.mrb[0].mxu0
    %1358 = vmatprep.mubr.f32.mxu0 0.0
    %1359 = vmatmul.mubr.f32.gmra.mrb[0].mxu0 %v1153
    %v1360 = vpop.f32.mrb[0].mxu0
    %v1361 = vadd.f32 %v1040, %v1360
    %v1362 = vpop.f32.mrb[0].mxu0
    %1363 = vmatprep.mubr.f32.mxu0 0.0
    %1364 = vmatmul.mubr.f32.gmra.mrb[0].mxu0 %v1156
    %v1365 = vpop.f32.mrb[0].mxu0
    %v1366 = vadd.f32 %v1045, %v1365
    %v1367 = vpop.f32.mrb[0].mxu0
    %1368 = vmatprep.mubr.f32.mxu0 0.0
    %1369 = vmatmul.mubr.f32.gmra.mrb[0].mxu0 %v1159
    %v1370 = vpop.f32.mrb[0].mxu0
    %v1371 = vadd.f32 %v1050, %v1370
    %v1372 = vpop.f32.mrb[0].mxu0
    %1373 = vmatprep.mubr.f32.mxu0 0.0
    %1374 = vmatmul.mubr.f32.gmra.mrb[0].mxu0 %v1162
    %v1375 = vpop.f32.mrb[0].mxu0
    %v1376 = vadd.f32 %v1055, %v1375
    %v1377 = vpop.f32.mrb[0].mxu0
    %1378 = vmatprep.mubr.f32.mxu0 0.0
    %1379 = vmatmul.mubr.f32.gmra.mrb[0].mxu0 %v1165
    %v1380 = vpop.f32.mrb[0].mxu0
    %v1381 = vadd.f32 %v1060, %v1380
    %v1382 = vpop.f32.mrb[0].mxu0
    %1383 = vmatprep.mubr.f32.mxu0 0.0
    %1384 = vmatmul.mubr.f32.gmra.mrb[0].mxu0 %v1168
    %v1385 = vpop.f32.mrb[0].mxu0
    %v1386 = vadd.f32 %v1065, %v1385
    %v1387 = vpop.f32.mrb[0].mxu0
    %1388 = vmatprep.mubr.f32.mxu0 0.0
    %1389 = vmatmul.mubr.f32.gmra.mrb[0].mxu0 %v1171
    %v1390 = vpop.f32.mrb[0].mxu0
    %v1391 = vadd.f32 %v1070, %v1390
    %v1392 = vpop.f32.mrb[0].mxu0
    %1393 = vmatprep.mubr.f32.mxu0 0.0
    %1394 = vmatmul.mubr.f32.gmra.mrb[0].mxu0 %v1174
    %v1395 = vpop.f32.mrb[0].mxu0
    %v1396 = vadd.f32 %v1075, %v1395
    %v1397 = vpop.f32.mrb[0].mxu0
    %1398 = vmatprep.mubr.f32.mxu0 0.0
    %1399 = vmatmul.mubr.f32.gmra.mrb[0].mxu0 %v1177
    %v1400 = vpop.f32.mrb[0].mxu0
    %v1401 = vadd.f32 %v1080, %v1400
    %v1402 = vpop.f32.mrb[0].mxu0
    %1403 = vdwg.mxu0
    %v1404 = vld [vmem:[%s8] sm:$0x1]
    %v1406 = vlaneseq
    %v1407 = vshrl.u32 %v1406, 7
    %v1408 = vsub.s32 0, %v1407
    %v1409 = vrot.slane %v1404, %v1408
    %v1411 = vadd.f32 %v1246, %v1409
    %v1412 = vadd.f32 %v1251, %v1409
    %v1413 = vadd.f32 %v1256, %v1409
    %v1414 = vadd.f32 %v1261, %v1409
    %v1415 = vadd.f32 %v1266, %v1409
    %v1416 = vadd.f32 %v1271, %v1409
    %v1417 = vadd.f32 %v1276, %v1409
    %v1418 = vadd.f32 %v1281, %v1409
    %v1419 = vadd.f32 %v1286, %v1409
    %v1420 = vadd.f32 %v1291, %v1409
    %v1421 = vadd.f32 %v1296, %v1409
    %v1422 = vadd.f32 %v1301, %v1409
    %v1423 = vadd.f32 %v1306, %v1409
    %v1424 = vadd.f32 %v1311, %v1409
    %v1425 = vadd.f32 %v1316, %v1409
    %v1426 = vadd.f32 %v1321, %v1409
    %v1427 = vadd.f32 %v1326, %v1409
    %v1428 = vadd.f32 %v1331, %v1409
    %v1429 = vadd.f32 %v1336, %v1409
    %v1430 = vadd.f32 %v1341, %v1409
    %v1431 = vadd.f32 %v1346, %v1409
    %v1432 = vadd.f32 %v1351, %v1409
    %v1433 = vadd.f32 %v1356, %v1409
    %v1434 = vadd.f32 %v1361, %v1409
    %v1435 = vadd.f32 %v1366, %v1409
    %v1436 = vadd.f32 %v1371, %v1409
    %v1437 = vadd.f32 %v1376, %v1409
    %v1438 = vadd.f32 %v1381, %v1409
    %v1439 = vadd.f32 %v1386, %v1409
    %v1440 = vadd.f32 %v1391, %v1409
    %v1441 = vadd.f32 %v1396, %v1409
    %v1442 = vadd.f32 %v1401, %v1409
    %v1443 = vld [vmem:[%s4] sm:$0x1]
    %v1444 = vld [vmem:[%s5] sm:$0x1]
    %1445 = vadd.xlane.f32.xlu0 %v1411
    %v1446 = vpop.xlane.xlu0 %1445
    %1447 = vadd.xlane.f32.xlu0 %v1412
    %v1448 = vpop.xlane.xlu0 %1447
    %1449 = vadd.xlane.f32.xlu0 %v1413
    %v1450 = vpop.xlane.xlu0 %1449
    %1451 = vadd.xlane.f32.xlu0 %v1414
    %v1452 = vpop.xlane.xlu0 %1451
    %1453 = vadd.xlane.f32.xlu0 %v1415
    %v1454 = vpop.xlane.xlu0 %1453
    %1455 = vadd.xlane.f32.xlu0 %v1416
    %v1456 = vpop.xlane.xlu0 %1455
    %1457 = vadd.xlane.f32.xlu0 %v1417
    %v1458 = vpop.xlane.xlu0 %1457
    %1459 = vadd.xlane.f32.xlu0 %v1418
    %v1460 = vpop.xlane.xlu0 %1459
    %1461 = vadd.xlane.f32.xlu0 %v1419
    %v1462 = vpop.xlane.xlu0 %1461
    %1463 = vadd.xlane.f32.xlu0 %v1420
    %v1464 = vpop.xlane.xlu0 %1463
    %1465 = vadd.xlane.f32.xlu0 %v1421
    %v1466 = vpop.xlane.xlu0 %1465
    %1467 = vadd.xlane.f32.xlu0 %v1422
    %v1468 = vpop.xlane.xlu0 %1467
    %1469 = vadd.xlane.f32.xlu0 %v1423
    %v1470 = vpop.xlane.xlu0 %1469
    %1471 = vadd.xlane.f32.xlu0 %v1424
    %v1472 = vpop.xlane.xlu0 %1471
    %1473 = vadd.xlane.f32.xlu0 %v1425
    %v1474 = vpop.xlane.xlu0 %1473
    %1475 = vadd.xlane.f32.xlu0 %v1426
    %v1476 = vpop.xlane.xlu0 %1475
    %1477 = vadd.xlane.f32.xlu0 %v1427
    %v1478 = vpop.xlane.xlu0 %1477
    %1479 = vadd.xlane.f32.xlu0 %v1428
    %v1480 = vpop.xlane.xlu0 %1479
    %1481 = vadd.xlane.f32.xlu0 %v1429
    %v1482 = vpop.xlane.xlu0 %1481
    %1483 = vadd.xlane.f32.xlu0 %v1430
    %v1484 = vpop.xlane.xlu0 %1483
    %1485 = vadd.xlane.f32.xlu0 %v1431
    %v1486 = vpop.xlane.xlu0 %1485
    %1487 = vadd.xlane.f32.xlu0 %v1432
    %v1488 = vpop.xlane.xlu0 %1487
    %1489 = vadd.xlane.f32.xlu0 %v1433
    %v1490 = vpop.xlane.xlu0 %1489
    %1491 = vadd.xlane.f32.xlu0 %v1434
    %v1492 = vpop.xlane.xlu0 %1491
    %1493 = vadd.xlane.f32.xlu0 %v1435
    %v1494 = vpop.xlane.xlu0 %1493
    %1495 = vadd.xlane.f32.xlu0 %v1436
    %v1496 = vpop.xlane.xlu0 %1495
    %1497 = vadd.xlane.f32.xlu0 %v1437
    %v1498 = vpop.xlane.xlu0 %1497
    %1499 = vadd.xlane.f32.xlu0 %v1438
    %v1500 = vpop.xlane.xlu0 %1499
    %1501 = vadd.xlane.f32.xlu0 %v1439
    %v1502 = vpop.xlane.xlu0 %1501
    %1503 = vadd.xlane.f32.xlu0 %v1440
    %v1504 = vpop.xlane.xlu0 %1503
    %1505 = vadd.xlane.f32.xlu0 %v1441
    %v1506 = vpop.xlane.xlu0 %1505
    %1507 = vadd.xlane.f32.xlu0 %v1442
    %v1508 = vpop.xlane.xlu0 %1507
    %v1509 = vmul.f32 %v1411, %v1411
    %v1510 = vmul.f32 %v1412, %v1412
    %v1511 = vmul.f32 %v1413, %v1413
    %v1512 = vmul.f32 %v1414, %v1414
    %v1513 = vmul.f32 %v1415, %v1415
    %v1514 = vmul.f32 %v1416, %v1416
    %v1515 = vmul.f32 %v1417, %v1417
    %v1516 = vmul.f32 %v1418, %v1418
    %v1517 = vmul.f32 %v1419, %v1419
    %v1518 = vmul.f32 %v1420, %v1420
    %v1519 = vmul.f32 %v1421, %v1421
    %v1520 = vmul.f32 %v1422, %v1422
    %v1521 = vmul.f32 %v1423, %v1423
    %v1522 = vmul.f32 %v1424, %v1424
    %v1523 = vmul.f32 %v1425, %v1425
    %v1524 = vmul.f32 %v1426, %v1426
    %v1525 = vmul.f32 %v1427, %v1427
    %v1526 = vmul.f32 %v1428, %v1428
    %v1527 = vmul.f32 %v1429, %v1429
    %v1528 = vmul.f32 %v1430, %v1430
    %v1529 = vmul.f32 %v1431, %v1431
    %v1530 = vmul.f32 %v1432, %v1432
    %v1531 = vmul.f32 %v1433, %v1433
    %v1532 = vmul.f32 %v1434, %v1434
    %v1533 = vmul.f32 %v1435, %v1435
    %v1534 = vmul.f32 %v1436, %v1436
    %v1535 = vmul.f32 %v1437, %v1437
    %v1536 = vmul.f32 %v1438, %v1438
    %v1537 = vmul.f32 %v1439, %v1439
    %v1538 = vmul.f32 %v1440, %v1440
    %v1539 = vmul.f32 %v1441, %v1441
    %v1540 = vmul.f32 %v1442, %v1442
    %1541 = vadd.xlane.f32.xlu0 %v1509
    %v1542 = vpop.xlane.xlu0 %1541
    %1543 = vadd.xlane.f32.xlu0 %v1510
    %v1544 = vpop.xlane.xlu0 %1543
    %1545 = vadd.xlane.f32.xlu0 %v1511
    %v1546 = vpop.xlane.xlu0 %1545
    %1547 = vadd.xlane.f32.xlu0 %v1512
    %v1548 = vpop.xlane.xlu0 %1547
    %1549 = vadd.xlane.f32.xlu0 %v1513
    %v1550 = vpop.xlane.xlu0 %1549
    %1551 = vadd.xlane.f32.xlu0 %v1514
    %v1552 = vpop.xlane.xlu0 %1551
    %1553 = vadd.xlane.f32.xlu0 %v1515
    %v1554 = vpop.xlane.xlu0 %1553
    %1555 = vadd.xlane.f32.xlu0 %v1516
    %v1556 = vpop.xlane.xlu0 %1555
    %1557 = vadd.xlane.f32.xlu0 %v1517
    %v1558 = vpop.xlane.xlu0 %1557
    %1559 = vadd.xlane.f32.xlu0 %v1518
    %v1560 = vpop.xlane.xlu0 %1559
    %1561 = vadd.xlane.f32.xlu0 %v1519
    %v1562 = vpop.xlane.xlu0 %1561
    %1563 = vadd.xlane.f32.xlu0 %v1520
    %v1564 = vpop.xlane.xlu0 %1563
    %1565 = vadd.xlane.f32.xlu0 %v1521
    %v1566 = vpop.xlane.xlu0 %1565
    %1567 = vadd.xlane.f32.xlu0 %v1522
    %v1568 = vpop.xlane.xlu0 %1567
    %1569 = vadd.xlane.f32.xlu0 %v1523
    %v1570 = vpop.xlane.xlu0 %1569
    %1571 = vadd.xlane.f32.xlu0 %v1524
    %v1572 = vpop.xlane.xlu0 %1571
    %1573 = vadd.xlane.f32.xlu0 %v1525
    %v1574 = vpop.xlane.xlu0 %1573
    %1575 = vadd.xlane.f32.xlu0 %v1526
    %v1576 = vpop.xlane.xlu0 %1575
    %1577 = vadd.xlane.f32.xlu0 %v1527
    %v1578 = vpop.xlane.xlu0 %1577
    %1579 = vadd.xlane.f32.xlu0 %v1528
    %v1580 = vpop.xlane.xlu0 %1579
    %1581 = vadd.xlane.f32.xlu0 %v1529
    %v1582 = vpop.xlane.xlu0 %1581
    %1583 = vadd.xlane.f32.xlu0 %v1530
    %v1584 = vpop.xlane.xlu0 %1583
    %1585 = vadd.xlane.f32.xlu0 %v1531
    %v1586 = vpop.xlane.xlu0 %1585
    %1587 = vadd.xlane.f32.xlu0 %v1532
    %v1588 = vpop.xlane.xlu0 %1587
    %1589 = vadd.xlane.f32.xlu0 %v1533
    %v1590 = vpop.xlane.xlu0 %1589
    %1591 = vadd.xlane.f32.xlu0 %v1534
    %v1592 = vpop.xlane.xlu0 %1591
    %1593 = vadd.xlane.f32.xlu0 %v1535
    %v1594 = vpop.xlane.xlu0 %1593
    %1595 = vadd.xlane.f32.xlu0 %v1536
    %v1596 = vpop.xlane.xlu0 %1595
    %1597 = vadd.xlane.f32.xlu0 %v1537
    %v1598 = vpop.xlane.xlu0 %1597
    %1599 = vadd.xlane.f32.xlu0 %v1538
    %v1600 = vpop.xlane.xlu0 %1599
    %1601 = vadd.xlane.f32.xlu0 %v1539
    %v1602 = vpop.xlane.xlu0 %1601
    %1603 = vadd.xlane.f32.xlu0 %v1540
    %v1604 = vpop.xlane.xlu0 %1603
    %v1605 = vmul.f32 %v1446, 0.03125
    %v1606 = vmul.f32 %v1448, 0.03125
    %v1607 = vmul.f32 %v1450, 0.03125
    %v1608 = vmul.f32 %v1452, 0.03125
    %v1609 = vmul.f32 %v1454, 0.03125
    %v1610 = vmul.f32 %v1456, 0.03125
    %v1611 = vmul.f32 %v1458, 0.03125
    %v1612 = vmul.f32 %v1460, 0.03125
    %v1613 = vmul.f32 %v1462, 0.03125
    %v1614 = vmul.f32 %v1464, 0.03125
    %v1615 = vmul.f32 %v1466, 0.03125
    %v1616 = vmul.f32 %v1468, 0.03125
    %v1617 = vmul.f32 %v1470, 0.03125
    %v1618 = vmul.f32 %v1472, 0.03125
    %v1619 = vmul.f32 %v1474, 0.03125
    %v1620 = vmul.f32 %v1476, 0.03125
    %v1621 = vmul.f32 %v1478, 0.03125
    %v1622 = vmul.f32 %v1480, 0.03125
    %v1623 = vmul.f32 %v1482, 0.03125
    %v1624 = vmul.f32 %v1484, 0.03125
    %v1625 = vmul.f32 %v1486, 0.03125
    %v1626 = vmul.f32 %v1488, 0.03125
    %v1627 = vmul.f32 %v1490, 0.03125
    %v1628 = vmul.f32 %v1492, 0.03125
    %v1629 = vmul.f32 %v1494, 0.03125
    %v1630 = vmul.f32 %v1496, 0.03125
    %v1631 = vmul.f32 %v1498, 0.03125
    %v1632 = vmul.f32 %v1500, 0.03125
    %v1633 = vmul.f32 %v1502, 0.03125
    %v1634 = vmul.f32 %v1504, 0.03125
    %v1635 = vmul.f32 %v1506, 0.03125
    %v1636 = vmul.f32 %v1508, 0.03125
    %v1637 = vmul.f32 %v1542, 0.03125
    %v1638 = vmul.f32 %v1544, 0.03125
    %v1639 = vmul.f32 %v1546, 0.03125
    %v1640 = vmul.f32 %v1548, 0.03125
    %v1641 = vmul.f32 %v1550, 0.03125
    %v1642 = vmul.f32 %v1552, 0.03125
    %v1643 = vmul.f32 %v1554, 0.03125
    %v1644 = vmul.f32 %v1556, 0.03125
    %v1645 = vmul.f32 %v1558, 0.03125
    %v1646 = vmul.f32 %v1560, 0.03125
    %v1647 = vmul.f32 %v1562, 0.03125
    %v1648 = vmul.f32 %v1564, 0.03125
    %v1649 = vmul.f32 %v1566, 0.03125
    %v1650 = vmul.f32 %v1568, 0.03125
    %v1651 = vmul.f32 %v1570, 0.03125
    %v1652 = vmul.f32 %v1572, 0.03125
    %v1653 = vmul.f32 %v1574, 0.03125
    %v1654 = vmul.f32 %v1576, 0.03125
    %v1655 = vmul.f32 %v1578, 0.03125
    %v1656 = vmul.f32 %v1580, 0.03125
    %v1657 = vmul.f32 %v1582, 0.03125
    %v1658 = vmul.f32 %v1584, 0.03125
    %v1659 = vmul.f32 %v1586, 0.03125
    %v1660 = vmul.f32 %v1588, 0.03125
    %v1661 = vmul.f32 %v1590, 0.03125
    %v1662 = vmul.f32 %v1592, 0.03125
    %v1663 = vmul.f32 %v1594, 0.03125
    %v1664 = vmul.f32 %v1596, 0.03125
    %v1665 = vmul.f32 %v1598, 0.03125
    %v1666 = vmul.f32 %v1600, 0.03125
    %v1667 = vmul.f32 %v1602, 0.03125
    %v1668 = vmul.f32 %v1604, 0.03125
    %v1669 = vmul.f32 %v1605, %v1605
    %v1670 = vmul.f32 %v1606, %v1606
    %v1671 = vmul.f32 %v1607, %v1607
    %v1672 = vmul.f32 %v1608, %v1608
    %v1673 = vmul.f32 %v1609, %v1609
    %v1674 = vmul.f32 %v1610, %v1610
    %v1675 = vmul.f32 %v1611, %v1611
    %v1676 = vmul.f32 %v1612, %v1612
    %v1677 = vmul.f32 %v1613, %v1613
    %v1678 = vmul.f32 %v1614, %v1614
    %v1679 = vmul.f32 %v1615, %v1615
    %v1680 = vmul.f32 %v1616, %v1616
    %v1681 = vmul.f32 %v1617, %v1617
    %v1682 = vmul.f32 %v1618, %v1618
    %v1683 = vmul.f32 %v1619, %v1619
    %v1684 = vmul.f32 %v1620, %v1620
    %v1685 = vmul.f32 %v1621, %v1621
    %v1686 = vmul.f32 %v1622, %v1622
    %v1687 = vmul.f32 %v1623, %v1623
    %v1688 = vmul.f32 %v1624, %v1624
    %v1689 = vmul.f32 %v1625, %v1625
    %v1690 = vmul.f32 %v1626, %v1626
    %v1691 = vmul.f32 %v1627, %v1627
    %v1692 = vmul.f32 %v1628, %v1628
    %v1693 = vmul.f32 %v1629, %v1629
    %v1694 = vmul.f32 %v1630, %v1630
    %v1695 = vmul.f32 %v1631, %v1631
    %v1696 = vmul.f32 %v1632, %v1632
    %v1697 = vmul.f32 %v1633, %v1633
    %v1698 = vmul.f32 %v1634, %v1634
    %v1699 = vmul.f32 %v1635, %v1635
    %v1700 = vmul.f32 %v1636, %v1636
    %v1701 = vsub.f32 %v1637, %v1669
    %v1702 = vsub.f32 %v1638, %v1670
    %v1703 = vsub.f32 %v1639, %v1671
    %v1704 = vsub.f32 %v1640, %v1672
    %v1705 = vsub.f32 %v1641, %v1673
    %v1706 = vsub.f32 %v1642, %v1674
    %v1707 = vsub.f32 %v1643, %v1675
    %v1708 = vsub.f32 %v1644, %v1676
    %v1709 = vsub.f32 %v1645, %v1677
    %v1710 = vsub.f32 %v1646, %v1678
    %v1711 = vsub.f32 %v1647, %v1679
    %v1712 = vsub.f32 %v1648, %v1680
    %v1713 = vsub.f32 %v1649, %v1681
    %v1714 = vsub.f32 %v1650, %v1682
    %v1715 = vsub.f32 %v1651, %v1683
    %v1716 = vsub.f32 %v1652, %v1684
    %v1717 = vsub.f32 %v1653, %v1685
    %v1718 = vsub.f32 %v1654, %v1686
    %v1719 = vsub.f32 %v1655, %v1687
    %v1720 = vsub.f32 %v1656, %v1688
    %v1721 = vsub.f32 %v1657, %v1689
    %v1722 = vsub.f32 %v1658, %v1690
    %v1723 = vsub.f32 %v1659, %v1691
    %v1724 = vsub.f32 %v1660, %v1692
    %v1725 = vsub.f32 %v1661, %v1693
    %v1726 = vsub.f32 %v1662, %v1694
    %v1727 = vsub.f32 %v1663, %v1695
    %v1728 = vsub.f32 %v1664, %v1696
    %v1729 = vsub.f32 %v1665, %v1697
    %v1730 = vsub.f32 %v1666, %v1698
    %v1731 = vsub.f32 %v1667, %v1699
    %v1732 = vsub.f32 %v1668, %v1700
    %v1733 = vmax.f32 %v1701, 0.0
    %v1734 = vmax.f32 %v1702, 0.0
    %v1735 = vmax.f32 %v1703, 0.0
    %v1736 = vmax.f32 %v1704, 0.0
    %v1737 = vmax.f32 %v1705, 0.0
    %v1738 = vmax.f32 %v1706, 0.0
    %v1739 = vmax.f32 %v1707, 0.0
    %v1740 = vmax.f32 %v1708, 0.0
    %v1741 = vmax.f32 %v1709, 0.0
    %v1742 = vmax.f32 %v1710, 0.0
    %v1743 = vmax.f32 %v1711, 0.0
    %v1744 = vmax.f32 %v1712, 0.0
    %v1745 = vmax.f32 %v1713, 0.0
    %v1746 = vmax.f32 %v1714, 0.0
    %v1747 = vmax.f32 %v1715, 0.0
    %v1748 = vmax.f32 %v1716, 0.0
    %v1749 = vmax.f32 %v1717, 0.0
    %v1750 = vmax.f32 %v1718, 0.0
    %v1751 = vmax.f32 %v1719, 0.0
    %v1752 = vmax.f32 %v1720, 0.0
    %v1753 = vmax.f32 %v1721, 0.0
    %v1754 = vmax.f32 %v1722, 0.0
    %v1755 = vmax.f32 %v1723, 0.0
    %v1756 = vmax.f32 %v1724, 0.0
    %v1757 = vmax.f32 %v1725, 0.0
    %v1758 = vmax.f32 %v1726, 0.0
    %v1759 = vmax.f32 %v1727, 0.0
    %v1760 = vmax.f32 %v1728, 0.0
    %v1761 = vmax.f32 %v1729, 0.0
    %v1762 = vmax.f32 %v1730, 0.0
    %v1763 = vmax.f32 %v1731, 0.0
    %v1764 = vmax.f32 %v1732, 0.0
    %v1765 = vsub.f32 %v1411, %v1605
    %v1766 = vsub.f32 %v1412, %v1606
    %v1767 = vsub.f32 %v1413, %v1607
    %v1768 = vsub.f32 %v1414, %v1608
    %v1769 = vsub.f32 %v1415, %v1609
    %v1770 = vsub.f32 %v1416, %v1610
    %v1771 = vsub.f32 %v1417, %v1611
    %v1772 = vsub.f32 %v1418, %v1612
    %v1773 = vsub.f32 %v1419, %v1613
    %v1774 = vsub.f32 %v1420, %v1614
    %v1775 = vsub.f32 %v1421, %v1615
    %v1776 = vsub.f32 %v1422, %v1616
    %v1777 = vsub.f32 %v1423, %v1617
    %v1778 = vsub.f32 %v1424, %v1618
    %v1779 = vsub.f32 %v1425, %v1619
    %v1780 = vsub.f32 %v1426, %v1620
    %v1781 = vsub.f32 %v1427, %v1621
    %v1782 = vsub.f32 %v1428, %v1622
    %v1783 = vsub.f32 %v1429, %v1623
    %v1784 = vsub.f32 %v1430, %v1624
    %v1785 = vsub.f32 %v1431, %v1625
    %v1786 = vsub.f32 %v1432, %v1626
    %v1787 = vsub.f32 %v1433, %v1627
    %v1788 = vsub.f32 %v1434, %v1628
    %v1789 = vsub.f32 %v1435, %v1629
    %v1790 = vsub.f32 %v1436, %v1630
    %v1791 = vsub.f32 %v1437, %v1631
    %v1792 = vsub.f32 %v1438, %v1632
    %v1793 = vsub.f32 %v1439, %v1633
    %v1794 = vsub.f32 %v1440, %v1634
    %v1795 = vsub.f32 %v1441, %v1635
    %v1796 = vsub.f32 %v1442, %v1636
    %v1797 = vadd.f32 %v1733, 1e-05
    %v1798 = vadd.f32 %v1734, 1e-05
    %v1799 = vadd.f32 %v1735, 1e-05
    %v1800 = vadd.f32 %v1736, 1e-05
    %v1801 = vadd.f32 %v1737, 1e-05
    %v1802 = vadd.f32 %v1738, 1e-05
    %v1803 = vadd.f32 %v1739, 1e-05
    %v1804 = vadd.f32 %v1740, 1e-05
    %v1805 = vadd.f32 %v1741, 1e-05
    %v1806 = vadd.f32 %v1742, 1e-05
    %v1807 = vadd.f32 %v1743, 1e-05
    %v1808 = vadd.f32 %v1744, 1e-05
    %v1809 = vadd.f32 %v1745, 1e-05
    %v1810 = vadd.f32 %v1746, 1e-05
    %v1811 = vadd.f32 %v1747, 1e-05
    %v1812 = vadd.f32 %v1748, 1e-05
    %v1813 = vadd.f32 %v1749, 1e-05
    %v1814 = vadd.f32 %v1750, 1e-05
    %v1815 = vadd.f32 %v1751, 1e-05
    %v1816 = vadd.f32 %v1752, 1e-05
    %v1817 = vadd.f32 %v1753, 1e-05
    %v1818 = vadd.f32 %v1754, 1e-05
    %v1819 = vadd.f32 %v1755, 1e-05
    %v1820 = vadd.f32 %v1756, 1e-05
    %v1821 = vadd.f32 %v1757, 1e-05
    %v1822 = vadd.f32 %v1758, 1e-05
    %v1823 = vadd.f32 %v1759, 1e-05
    %v1824 = vadd.f32 %v1760, 1e-05
    %v1825 = vadd.f32 %v1761, 1e-05
    %v1826 = vadd.f32 %v1762, 1e-05
    %v1827 = vadd.f32 %v1763, 1e-05
    %v1828 = vadd.f32 %v1764, 1e-05
    %v1829 = vrsqrt.pop %v1797
    %v1830 = vrsqrt.pop %v1798
    %v1831 = vrsqrt.pop %v1799
    %v1832 = vrsqrt.pop %v1800
    %v1833 = vrsqrt.pop %v1801
    %v1834 = vrsqrt.pop %v1802
    %v1835 = vrsqrt.pop %v1803
    %v1836 = vrsqrt.pop %v1804
    %v1837 = vrsqrt.pop %v1805
    %v1838 = vrsqrt.pop %v1806
    %v1839 = vrsqrt.pop %v1807
    %v1840 = vrsqrt.pop %v1808
    %v1841 = vrsqrt.pop %v1809
    %v1842 = vrsqrt.pop %v1810
    %v1843 = vrsqrt.pop %v1811
    %v1844 = vrsqrt.pop %v1812
    %v1845 = vrsqrt.pop %v1813
    %v1846 = vrsqrt.pop %v1814
    %v1847 = vrsqrt.pop %v1815
    %v1848 = vrsqrt.pop %v1816
    %v1849 = vrsqrt.pop %v1817
    %v1850 = vrsqrt.pop %v1818
    %v1851 = vrsqrt.pop %v1819
    %v1852 = vrsqrt.pop %v1820
    %v1853 = vrsqrt.pop %v1821
    %v1854 = vrsqrt.pop %v1822
    %v1855 = vrsqrt.pop %v1823
    %v1856 = vrsqrt.pop %v1824
    %v1857 = vrsqrt.pop %v1825
    %v1858 = vrsqrt.pop %v1826
    %v1859 = vrsqrt.pop %v1827
    %v1860 = vrsqrt.pop %v1828
    %v1861 = vmul.f32 %v1765, %v1829
    %v1862 = vmul.f32 %v1766, %v1830
    %v1863 = vmul.f32 %v1767, %v1831
    %v1864 = vmul.f32 %v1768, %v1832
    %v1865 = vmul.f32 %v1769, %v1833
    %v1866 = vmul.f32 %v1770, %v1834
    %v1867 = vmul.f32 %v1771, %v1835
    %v1868 = vmul.f32 %v1772, %v1836
    %v1869 = vmul.f32 %v1773, %v1837
    %v1870 = vmul.f32 %v1774, %v1838
    %v1871 = vmul.f32 %v1775, %v1839
    %v1872 = vmul.f32 %v1776, %v1840
    %v1873 = vmul.f32 %v1777, %v1841
    %v1874 = vmul.f32 %v1778, %v1842
    %v1875 = vmul.f32 %v1779, %v1843
    %v1876 = vmul.f32 %v1780, %v1844
    %v1877 = vmul.f32 %v1781, %v1845
    %v1878 = vmul.f32 %v1782, %v1846
    %v1879 = vmul.f32 %v1783, %v1847
    %v1880 = vmul.f32 %v1784, %v1848
    %v1881 = vmul.f32 %v1785, %v1849
    %v1882 = vmul.f32 %v1786, %v1850
    %v1883 = vmul.f32 %v1787, %v1851
    %v1884 = vmul.f32 %v1788, %v1852
    %v1885 = vmul.f32 %v1789, %v1853
    %v1886 = vmul.f32 %v1790, %v1854
    %v1887 = vmul.f32 %v1791, %v1855
    %v1888 = vmul.f32 %v1792, %v1856
    %v1889 = vmul.f32 %v1793, %v1857
    %v1890 = vmul.f32 %v1794, %v1858
    %v1891 = vmul.f32 %v1795, %v1859
    %v1892 = vmul.f32 %v1796, %v1860
    %v1894 = vlaneseq
    %v1895 = vshrl.u32 %v1894, 7
    %v1896 = vsub.s32 0, %v1895
    %v1897 = vrot.slane %v1443, %v1896
    %v1899 = vmul.f32 %v1861, %v1897
    %v1900 = vmul.f32 %v1862, %v1897
    %v1901 = vmul.f32 %v1863, %v1897
    %v1902 = vmul.f32 %v1864, %v1897
    %v1903 = vmul.f32 %v1865, %v1897
    %v1904 = vmul.f32 %v1866, %v1897
    %v1905 = vmul.f32 %v1867, %v1897
    %v1906 = vmul.f32 %v1868, %v1897
    %v1907 = vmul.f32 %v1869, %v1897
    %v1908 = vmul.f32 %v1870, %v1897
    %v1909 = vmul.f32 %v1871, %v1897
    %v1910 = vmul.f32 %v1872, %v1897
    %v1911 = vmul.f32 %v1873, %v1897
    %v1912 = vmul.f32 %v1874, %v1897
    %v1913 = vmul.f32 %v1875, %v1897
    %v1914 = vmul.f32 %v1876, %v1897
    %v1915 = vmul.f32 %v1877, %v1897
    %v1916 = vmul.f32 %v1878, %v1897
    %v1917 = vmul.f32 %v1879, %v1897
    %v1918 = vmul.f32 %v1880, %v1897
    %v1919 = vmul.f32 %v1881, %v1897
    %v1920 = vmul.f32 %v1882, %v1897
    %v1921 = vmul.f32 %v1883, %v1897
    %v1922 = vmul.f32 %v1884, %v1897
    %v1923 = vmul.f32 %v1885, %v1897
    %v1924 = vmul.f32 %v1886, %v1897
    %v1925 = vmul.f32 %v1887, %v1897
    %v1926 = vmul.f32 %v1888, %v1897
    %v1927 = vmul.f32 %v1889, %v1897
    %v1928 = vmul.f32 %v1890, %v1897
    %v1929 = vmul.f32 %v1891, %v1897
    %v1930 = vmul.f32 %v1892, %v1897
    %v1932 = vlaneseq
    %v1933 = vshrl.u32 %v1932, 7
    %v1934 = vsub.s32 0, %v1933
    %v1935 = vrot.slane %v1444, %v1934
    %v1937 = vadd.f32 %v1899, %v1935
    %v1938 = vadd.f32 %v1900, %v1935
    %v1939 = vadd.f32 %v1901, %v1935
    %v1940 = vadd.f32 %v1902, %v1935
    %v1941 = vadd.f32 %v1903, %v1935
    %v1942 = vadd.f32 %v1904, %v1935
    %v1943 = vadd.f32 %v1905, %v1935
    %v1944 = vadd.f32 %v1906, %v1935
    %v1945 = vadd.f32 %v1907, %v1935
    %v1946 = vadd.f32 %v1908, %v1935
    %v1947 = vadd.f32 %v1909, %v1935
    %v1948 = vadd.f32 %v1910, %v1935
    %v1949 = vadd.f32 %v1911, %v1935
    %v1950 = vadd.f32 %v1912, %v1935
    %v1951 = vadd.f32 %v1913, %v1935
    %v1952 = vadd.f32 %v1914, %v1935
    %v1953 = vadd.f32 %v1915, %v1935
    %v1954 = vadd.f32 %v1916, %v1935
    %v1955 = vadd.f32 %v1917, %v1935
    %v1956 = vadd.f32 %v1918, %v1935
    %v1957 = vadd.f32 %v1919, %v1935
    %v1958 = vadd.f32 %v1920, %v1935
    %v1959 = vadd.f32 %v1921, %v1935
    %v1960 = vadd.f32 %v1922, %v1935
    %v1961 = vadd.f32 %v1923, %v1935
    %v1962 = vadd.f32 %v1924, %v1935
    %v1963 = vadd.f32 %v1925, %v1935
    %v1964 = vadd.f32 %v1926, %v1935
    %v1965 = vadd.f32 %v1927, %v1935
    %v1966 = vadd.f32 %v1928, %v1935
    %v1967 = vadd.f32 %v1929, %v1935
    %v1968 = vadd.f32 %v1930, %v1935
    %v1969 = vmul.f32 %v1937, 0.02
    %v1970 = vmul.f32 %v1938, 0.02
    %v1971 = vmul.f32 %v1939, 0.02
    %v1972 = vmul.f32 %v1940, 0.02
    %v1973 = vmul.f32 %v1941, 0.02
    %v1974 = vmul.f32 %v1942, 0.02
    %v1975 = vmul.f32 %v1943, 0.02
    %v1976 = vmul.f32 %v1944, 0.02
    %v1977 = vmul.f32 %v1945, 0.02
    %v1978 = vmul.f32 %v1946, 0.02
    %v1979 = vmul.f32 %v1947, 0.02
    %v1980 = vmul.f32 %v1948, 0.02
    %v1981 = vmul.f32 %v1949, 0.02
    %v1982 = vmul.f32 %v1950, 0.02
    %v1983 = vmul.f32 %v1951, 0.02
    %v1984 = vmul.f32 %v1952, 0.02
    %v1985 = vmul.f32 %v1953, 0.02
    %v1986 = vmul.f32 %v1954, 0.02
    %v1987 = vmul.f32 %v1955, 0.02
    %v1988 = vmul.f32 %v1956, 0.02
    %v1989 = vmul.f32 %v1957, 0.02
    %v1990 = vmul.f32 %v1958, 0.02
    %v1991 = vmul.f32 %v1959, 0.02
    %v1992 = vmul.f32 %v1960, 0.02
    %v1993 = vmul.f32 %v1961, 0.02
    %v1994 = vmul.f32 %v1962, 0.02
    %v1995 = vmul.f32 %v1963, 0.02
    %v1996 = vmul.f32 %v1964, 0.02
    %v1997 = vmul.f32 %v1965, 0.02
    %v1998 = vmul.f32 %v1966, 0.02
    %v1999 = vmul.f32 %v1967, 0.02
    %v2000 = vmul.f32 %v1968, 0.02
    %v2001 = vmax.f32 %v1937, %v1969
    %v2002 = vmax.f32 %v1938, %v1970
    %v2003 = vmax.f32 %v1939, %v1971
    %v2004 = vmax.f32 %v1940, %v1972
    %v2005 = vmax.f32 %v1941, %v1973
    %v2006 = vmax.f32 %v1942, %v1974
    %v2007 = vmax.f32 %v1943, %v1975
    %v2008 = vmax.f32 %v1944, %v1976
    %v2009 = vmax.f32 %v1945, %v1977
    %v2010 = vmax.f32 %v1946, %v1978
    %v2011 = vmax.f32 %v1947, %v1979
    %v2012 = vmax.f32 %v1948, %v1980
    %v2013 = vmax.f32 %v1949, %v1981
    %v2014 = vmax.f32 %v1950, %v1982
    %v2015 = vmax.f32 %v1951, %v1983
    %v2016 = vmax.f32 %v1952, %v1984
    %v2017 = vmax.f32 %v1953, %v1985
    %v2018 = vmax.f32 %v1954, %v1986
    %v2019 = vmax.f32 %v1955, %v1987
    %v2020 = vmax.f32 %v1956, %v1988
    %v2021 = vmax.f32 %v1957, %v1989
    %v2022 = vmax.f32 %v1958, %v1990
    %v2023 = vmax.f32 %v1959, %v1991
    %v2024 = vmax.f32 %v1960, %v1992
    %v2025 = vmax.f32 %v1961, %v1993
    %v2026 = vmax.f32 %v1962, %v1994
    %v2027 = vmax.f32 %v1963, %v1995
    %v2028 = vmax.f32 %v1964, %v1996
    %v2029 = vmax.f32 %v1965, %v1997
    %v2030 = vmax.f32 %v1966, %v1998
    %v2031 = vmax.f32 %v1967, %v1999
    %v2032 = vmax.f32 %v1968, %v2000
    %v2033 = vld [vmem:[%s9] sm:$0xff]
    %v2034 = vld [vmem:[%s9 + $0x8] sm:$0xff]
    %v2035 = vld [vmem:[%s9 + $0x10] sm:$0xff]
    %v2036 = vld [vmem:[%s9 + $0x18] sm:$0xff]
    %v2037 = vld [vmem:[%s9 + $0x20] sm:$0xff]
    %v2038 = vld [vmem:[%s9 + $0x28] sm:$0xff]
    %v2039 = vld [vmem:[%s9 + $0x30] sm:$0xff]
    %v2040 = vld [vmem:[%s9 + $0x38] sm:$0xff]
    %v2041 = vld [vmem:[%s9 + $0x40] sm:$0xff]
    %v2042 = vld [vmem:[%s9 + $0x48] sm:$0xff]
    %v2043 = vld [vmem:[%s9 + $0x50] sm:$0xff]
    %v2044 = vld [vmem:[%s9 + $0x58] sm:$0xff]
    %v2045 = vld [vmem:[%s9 + $0x60] sm:$0xff]
    %v2046 = vld [vmem:[%s9 + $0x68] sm:$0xff]
    %v2047 = vld [vmem:[%s9 + $0x70] sm:$0xff]
    %v2048 = vld [vmem:[%s9 + $0x78] sm:$0xff]
    %v2049 = vld [vmem:[%s10] sm:$0xff]
    %v2050 = vld [vmem:[%s10 + $0x8] sm:$0xff]
    %v2052 = vsel %vm105, %v39, 0
    %v2055 = vsel %vm105, %v40, 0
    %v2058 = vsel %vm105, %v41, 0
    %v2061 = vsel %vm105, %v42, 0
    %v2064 = vsel %vm105, %v43, 0
    %v2067 = vsel %vm105, %v44, 0
    %v2070 = vsel %vm105, %v45, 0
    %v2073 = vsel %vm105, %v46, 0
    %v2076 = vsel %vm105, %v47, 0
    %v2079 = vsel %vm105, %v48, 0
    %v2082 = vsel %vm105, %v49, 0
    %v2085 = vsel %vm105, %v50, 0
    %v2088 = vsel %vm105, %v51, 0
    %v2091 = vsel %vm105, %v52, 0
    %v2094 = vsel %vm105, %v53, 0
    %v2097 = vsel %vm105, %v54, 0
    %v2100 = vsel %vm105, %v55, 0
    %v2103 = vsel %vm105, %v56, 0
    %v2106 = vsel %vm105, %v57, 0
    %v2109 = vsel %vm105, %v58, 0
    %v2112 = vsel %vm105, %v59, 0
    %v2115 = vsel %vm105, %v60, 0
    %v2118 = vsel %vm105, %v61, 0
    %v2121 = vsel %vm105, %v62, 0
    %v2124 = vsel %vm105, %v63, 0
    %v2127 = vsel %vm105, %v64, 0
    %v2130 = vsel %vm105, %v65, 0
    %v2133 = vsel %vm105, %v66, 0
    %v2136 = vsel %vm105, %v67, 0
    %v2139 = vsel %vm105, %v68, 0
    %v2142 = vsel %vm105, %v69, 0
    %v2145 = vsel %vm105, %v70, 0
    %2147 = vmatprep.subr.mxu0 0.0
    %2148 = vmatpush1.msra.mxu0 %v2049
    %2149 = vmatprep.subr.mxu0 0.0
    %2150 = vmatpush1.msra.mxu0 %v2050
    %2151 = vmatprep.subr.mxu0 0.0
    %2152 = vmatpush1.msra.mxu0 0.0
    %2153 = vmatprep.subr.mxu0 0.0
    %2154 = vmatpush1.msra.mxu0 0.0
    %2155 = vmatprep.subr.mxu0 0.0
    %2156 = vmatpush1.msra.mxu0 0.0
    %2157 = vmatprep.subr.mxu0 0.0
    %2158 = vmatpush1.msra.mxu0 0.0
    %2159 = vmatprep.subr.mxu0 0.0
    %2160 = vmatpush1.msra.mxu0 0.0
    %2161 = vmatprep.subr.mxu0 0.0
    %2162 = vmatpush1.msra.mxu0 0.0
    %2163 = vmatprep.subr.mxu0 0.0
    %2164 = vmatpush1.msra.mxu0 0.0
    %2165 = vmatprep.subr.mxu0 0.0
    %2166 = vmatpush1.msra.mxu0 0.0
    %2167 = vmatprep.subr.mxu0 0.0
    %2168 = vmatpush1.msra.mxu0 0.0
    %2169 = vmatprep.subr.mxu0 0.0
    %2170 = vmatpush1.msra.mxu0 0.0
    %2171 = vmatprep.subr.mxu0 0.0
    %2172 = vmatpush1.msra.mxu0 0.0
    %2173 = vmatprep.subr.mxu0 0.0
    %2174 = vmatpush1.msra.mxu0 0.0
    %2175 = vmatprep.subr.mxu0 0.0
    %2176 = vmatpush1.msra.mxu0 0.0
    %2177 = vmatprep.subr.mxu0 0.0
    %2178 = vmatpush1.msra.mxu0 0.0
    %2179 = vmatprep.subr.mxu0 0.0
    %2180 = vmatpush1.msra.mxu0 0.0
    %2181 = vmatprep.subr.mxu0 0.0
    %2182 = vmatpush1.msra.mxu0 0.0
    %2183 = vmatprep.subr.mxu0 0.0
    %2184 = vmatpush1.msra.mxu0 0.0
    %2185 = vmatprep.subr.mxu0 0.0
    %2186 = vmatpush1.msra.mxu0 0.0
    %2187 = vmatprep.subr.mxu0 0.0
    %2188 = vmatpush1.msra.mxu0 0.0
    %2189 = vmatprep.subr.mxu0 0.0
    %2190 = vmatpush1.msra.mxu0 0.0
    %2191 = vmatprep.subr.mxu0 0.0
    %2192 = vmatpush1.msra.mxu0 0.0
    %2193 = vmatprep.subr.mxu0 0.0
    %2194 = vmatpush1.msra.mxu0 0.0
    %2195 = vmatprep.subr.mxu0 0.0
    %2196 = vmatpush1.msra.mxu0 0.0
    %2197 = vmatprep.subr.mxu0 0.0
    %2198 = vmatpush1.msra.mxu0 0.0
    %2199 = vmatprep.subr.mxu0 0.0
    %2200 = vmatpush1.msra.mxu0 0.0
    %2201 = vmatprep.subr.mxu0 0.0
    %2202 = vmatpush1.msra.mxu0 0.0
    %2203 = vmatprep.subr.mxu0 0.0
    %2204 = vmatpush1.msra.mxu0 0.0
    %2205 = vmatprep.subr.mxu0 0.0
    %2206 = vmatpush1.msra.mxu0 0.0
    %2207 = vmatprep.subr.mxu0 0.0
    %2208 = vmatpush1.msra.mxu0 0.0
    %2209 = vmatprep.subr.mxu0 0.0
    %2210 = vmatpush1.msra.mxu0 0.0
    %2211 = vmatprep.mubr.f32.mxu0 0.0
    %2212 = vmatmul.mubr.f32.gmra.mrb[0].mxu0 %v2052
    %v2213 = vpop.f32.mrb[0].mxu0
    %v2214 = vadd.f32 0.0, %v2213
    %v2215 = vpop.f32.mrb[0].mxu0
    %2216 = vmatprep.mubr.f32.mxu0 0.0
    %2217 = vmatmul.mubr.f32.gmra.mrb[0].mxu0 %v2055
    %v2218 = vpop.f32.mrb[0].mxu0
    %v2219 = vadd.f32 0.0, %v2218
    %v2220 = vpop.f32.mrb[0].mxu0
    %2221 = vmatprep.mubr.f32.mxu0 0.0
    %2222 = vmatmul.mubr.f32.gmra.mrb[0].mxu0 %v2058
    %v2223 = vpop.f32.mrb[0].mxu0
    %v2224 = vadd.f32 0.0, %v2223
    %v2225 = vpop.f32.mrb[0].mxu0
    %2226 = vmatprep.mubr.f32.mxu0 0.0
    %2227 = vmatmul.mubr.f32.gmra.mrb[0].mxu0 %v2061
    %v2228 = vpop.f32.mrb[0].mxu0
    %v2229 = vadd.f32 0.0, %v2228
    %v2230 = vpop.f32.mrb[0].mxu0
    %2231 = vmatprep.mubr.f32.mxu0 0.0
    %2232 = vmatmul.mubr.f32.gmra.mrb[0].mxu0 %v2064
    %v2233 = vpop.f32.mrb[0].mxu0
    %v2234 = vadd.f32 0.0, %v2233
    %v2235 = vpop.f32.mrb[0].mxu0
    %2236 = vmatprep.mubr.f32.mxu0 0.0
    %2237 = vmatmul.mubr.f32.gmra.mrb[0].mxu0 %v2067
    %v2238 = vpop.f32.mrb[0].mxu0
    %v2239 = vadd.f32 0.0, %v2238
    %v2240 = vpop.f32.mrb[0].mxu0
    %2241 = vmatprep.mubr.f32.mxu0 0.0
    %2242 = vmatmul.mubr.f32.gmra.mrb[0].mxu0 %v2070
    %v2243 = vpop.f32.mrb[0].mxu0
    %v2244 = vadd.f32 0.0, %v2243
    %v2245 = vpop.f32.mrb[0].mxu0
    %2246 = vmatprep.mubr.f32.mxu0 0.0
    %2247 = vmatmul.mubr.f32.gmra.mrb[0].mxu0 %v2073
    %v2248 = vpop.f32.mrb[0].mxu0
    %v2249 = vadd.f32 0.0, %v2248
    %v2250 = vpop.f32.mrb[0].mxu0
    %2251 = vmatprep.mubr.f32.mxu0 0.0
    %2252 = vmatmul.mubr.f32.gmra.mrb[0].mxu0 %v2076
    %v2253 = vpop.f32.mrb[0].mxu0
    %v2254 = vadd.f32 0.0, %v2253
    %v2255 = vpop.f32.mrb[0].mxu0
    %2256 = vmatprep.mubr.f32.mxu0 0.0
    %2257 = vmatmul.mubr.f32.gmra.mrb[0].mxu0 %v2079
    %v2258 = vpop.f32.mrb[0].mxu0
    %v2259 = vadd.f32 0.0, %v2258
    %v2260 = vpop.f32.mrb[0].mxu0
    %2261 = vmatprep.mubr.f32.mxu0 0.0
    %2262 = vmatmul.mubr.f32.gmra.mrb[0].mxu0 %v2082
    %v2263 = vpop.f32.mrb[0].mxu0
    %v2264 = vadd.f32 0.0, %v2263
    %v2265 = vpop.f32.mrb[0].mxu0
    %2266 = vmatprep.mubr.f32.mxu0 0.0
    %2267 = vmatmul.mubr.f32.gmra.mrb[0].mxu0 %v2085
    %v2268 = vpop.f32.mrb[0].mxu0
    %v2269 = vadd.f32 0.0, %v2268
    %v2270 = vpop.f32.mrb[0].mxu0
    %2271 = vmatprep.mubr.f32.mxu0 0.0
    %2272 = vmatmul.mubr.f32.gmra.mrb[0].mxu0 %v2088
    %v2273 = vpop.f32.mrb[0].mxu0
    %v2274 = vadd.f32 0.0, %v2273
    %v2275 = vpop.f32.mrb[0].mxu0
    %2276 = vmatprep.mubr.f32.mxu0 0.0
    %2277 = vmatmul.mubr.f32.gmra.mrb[0].mxu0 %v2091
    %v2278 = vpop.f32.mrb[0].mxu0
    %v2279 = vadd.f32 0.0, %v2278
    %v2280 = vpop.f32.mrb[0].mxu0
    %2281 = vmatprep.mubr.f32.mxu0 0.0
    %2282 = vmatmul.mubr.f32.gmra.mrb[0].mxu0 %v2094
    %v2283 = vpop.f32.mrb[0].mxu0
    %v2284 = vadd.f32 0.0, %v2283
    %v2285 = vpop.f32.mrb[0].mxu0
    %2286 = vmatprep.mubr.f32.mxu0 0.0
    %2287 = vmatmul.mubr.f32.gmra.mrb[0].mxu0 %v2097
    %v2288 = vpop.f32.mrb[0].mxu0
    %v2289 = vadd.f32 0.0, %v2288
    %v2290 = vpop.f32.mrb[0].mxu0
    %2291 = vmatprep.mubr.f32.mxu0 0.0
    %2292 = vmatmul.mubr.f32.gmra.mrb[0].mxu0 %v2100
    %v2293 = vpop.f32.mrb[0].mxu0
    %v2294 = vadd.f32 0.0, %v2293
    %v2295 = vpop.f32.mrb[0].mxu0
    %2296 = vmatprep.mubr.f32.mxu0 0.0
    %2297 = vmatmul.mubr.f32.gmra.mrb[0].mxu0 %v2103
    %v2298 = vpop.f32.mrb[0].mxu0
    %v2299 = vadd.f32 0.0, %v2298
    %v2300 = vpop.f32.mrb[0].mxu0
    %2301 = vmatprep.mubr.f32.mxu0 0.0
    %2302 = vmatmul.mubr.f32.gmra.mrb[0].mxu0 %v2106
    %v2303 = vpop.f32.mrb[0].mxu0
    %v2304 = vadd.f32 0.0, %v2303
    %v2305 = vpop.f32.mrb[0].mxu0
    %2306 = vmatprep.mubr.f32.mxu0 0.0
    %2307 = vmatmul.mubr.f32.gmra.mrb[0].mxu0 %v2109
    %v2308 = vpop.f32.mrb[0].mxu0
    %v2309 = vadd.f32 0.0, %v2308
    %v2310 = vpop.f32.mrb[0].mxu0
    %2311 = vmatprep.mubr.f32.mxu0 0.0
    %2312 = vmatmul.mubr.f32.gmra.mrb[0].mxu0 %v2112
    %v2313 = vpop.f32.mrb[0].mxu0
    %v2314 = vadd.f32 0.0, %v2313
    %v2315 = vpop.f32.mrb[0].mxu0
    %2316 = vmatprep.mubr.f32.mxu0 0.0
    %2317 = vmatmul.mubr.f32.gmra.mrb[0].mxu0 %v2115
    %v2318 = vpop.f32.mrb[0].mxu0
    %v2319 = vadd.f32 0.0, %v2318
    %v2320 = vpop.f32.mrb[0].mxu0
    %2321 = vmatprep.mubr.f32.mxu0 0.0
    %2322 = vmatmul.mubr.f32.gmra.mrb[0].mxu0 %v2118
    %v2323 = vpop.f32.mrb[0].mxu0
    %v2324 = vadd.f32 0.0, %v2323
    %v2325 = vpop.f32.mrb[0].mxu0
    %2326 = vmatprep.mubr.f32.mxu0 0.0
    %2327 = vmatmul.mubr.f32.gmra.mrb[0].mxu0 %v2121
    %v2328 = vpop.f32.mrb[0].mxu0
    %v2329 = vadd.f32 0.0, %v2328
    %v2330 = vpop.f32.mrb[0].mxu0
    %2331 = vmatprep.mubr.f32.mxu0 0.0
    %2332 = vmatmul.mubr.f32.gmra.mrb[0].mxu0 %v2124
    %v2333 = vpop.f32.mrb[0].mxu0
    %v2334 = vadd.f32 0.0, %v2333
    %v2335 = vpop.f32.mrb[0].mxu0
    %2336 = vmatprep.mubr.f32.mxu0 0.0
    %2337 = vmatmul.mubr.f32.gmra.mrb[0].mxu0 %v2127
    %v2338 = vpop.f32.mrb[0].mxu0
    %v2339 = vadd.f32 0.0, %v2338
    %v2340 = vpop.f32.mrb[0].mxu0
    %2341 = vmatprep.mubr.f32.mxu0 0.0
    %2342 = vmatmul.mubr.f32.gmra.mrb[0].mxu0 %v2130
    %v2343 = vpop.f32.mrb[0].mxu0
    %v2344 = vadd.f32 0.0, %v2343
    %v2345 = vpop.f32.mrb[0].mxu0
    %2346 = vmatprep.mubr.f32.mxu0 0.0
    %2347 = vmatmul.mubr.f32.gmra.mrb[0].mxu0 %v2133
    %v2348 = vpop.f32.mrb[0].mxu0
    %v2349 = vadd.f32 0.0, %v2348
    %v2350 = vpop.f32.mrb[0].mxu0
    %2351 = vmatprep.mubr.f32.mxu0 0.0
    %2352 = vmatmul.mubr.f32.gmra.mrb[0].mxu0 %v2136
    %v2353 = vpop.f32.mrb[0].mxu0
    %v2354 = vadd.f32 0.0, %v2353
    %v2355 = vpop.f32.mrb[0].mxu0
    %2356 = vmatprep.mubr.f32.mxu0 0.0
    %2357 = vmatmul.mubr.f32.gmra.mrb[0].mxu0 %v2139
    %v2358 = vpop.f32.mrb[0].mxu0
    %v2359 = vadd.f32 0.0, %v2358
    %v2360 = vpop.f32.mrb[0].mxu0
    %2361 = vmatprep.mubr.f32.mxu0 0.0
    %2362 = vmatmul.mubr.f32.gmra.mrb[0].mxu0 %v2142
    %v2363 = vpop.f32.mrb[0].mxu0
    %v2364 = vadd.f32 0.0, %v2363
    %v2365 = vpop.f32.mrb[0].mxu0
    %2366 = vmatprep.mubr.f32.mxu0 0.0
    %2367 = vmatmul.mubr.f32.gmra.mrb[0].mxu0 %v2145
    %v2368 = vpop.f32.mrb[0].mxu0
    %v2369 = vadd.f32 0.0, %v2368
    %v2370 = vpop.f32.mrb[0].mxu0
    %2371 = vdwg.mxu0
    %2372 = vmatprep.subr.mxu0 0.0
    %2373 = vmatpush1.msra.mxu0 %v2033
    %2374 = vmatprep.subr.mxu0 0.0
    %2375 = vmatpush1.msra.mxu0 %v2034
    %2376 = vmatprep.subr.mxu0 0.0
    %2377 = vmatpush1.msra.mxu0 %v2035
    %2378 = vmatprep.subr.mxu0 0.0
    %2379 = vmatpush1.msra.mxu0 %v2036
    %2380 = vmatprep.subr.mxu0 0.0
    %2381 = vmatpush1.msra.mxu0 %v2037
    %2382 = vmatprep.subr.mxu0 0.0
    %2383 = vmatpush1.msra.mxu0 %v2038
    %2384 = vmatprep.subr.mxu0 0.0
    %2385 = vmatpush1.msra.mxu0 %v2039
    %2386 = vmatprep.subr.mxu0 0.0
    %2387 = vmatpush1.msra.mxu0 %v2040
    %2388 = vmatprep.subr.mxu0 0.0
    %2389 = vmatpush1.msra.mxu0 %v2041
    %2390 = vmatprep.subr.mxu0 0.0
    %2391 = vmatpush1.msra.mxu0 %v2042
    %2392 = vmatprep.subr.mxu0 0.0
    %2393 = vmatpush1.msra.mxu0 %v2043
    %2394 = vmatprep.subr.mxu0 0.0
    %2395 = vmatpush1.msra.mxu0 %v2044
    %2396 = vmatprep.subr.mxu0 0.0
    %2397 = vmatpush1.msra.mxu0 %v2045
    %2398 = vmatprep.subr.mxu0 0.0
    %2399 = vmatpush1.msra.mxu0 %v2046
    %2400 = vmatprep.subr.mxu0 0.0
    %2401 = vmatpush1.msra.mxu0 %v2047
    %2402 = vmatprep.subr.mxu0 0.0
    %2403 = vmatpush1.msra.mxu0 %v2048
    %2404 = vmatprep.subr.mxu0 0.0
    %2405 = vmatpush1.msra.mxu0 0.0
    %2406 = vmatprep.subr.mxu0 0.0
    %2407 = vmatpush1.msra.mxu0 0.0
    %2408 = vmatprep.subr.mxu0 0.0
    %2409 = vmatpush1.msra.mxu0 0.0
    %2410 = vmatprep.subr.mxu0 0.0
    %2411 = vmatpush1.msra.mxu0 0.0
    %2412 = vmatprep.subr.mxu0 0.0
    %2413 = vmatpush1.msra.mxu0 0.0
    %2414 = vmatprep.subr.mxu0 0.0
    %2415 = vmatpush1.msra.mxu0 0.0
    %2416 = vmatprep.subr.mxu0 0.0
    %2417 = vmatpush1.msra.mxu0 0.0
    %2418 = vmatprep.subr.mxu0 0.0
    %2419 = vmatpush1.msra.mxu0 0.0
    %2420 = vmatprep.subr.mxu0 0.0
    %2421 = vmatpush1.msra.mxu0 0.0
    %2422 = vmatprep.subr.mxu0 0.0
    %2423 = vmatpush1.msra.mxu0 0.0
    %2424 = vmatprep.subr.mxu0 0.0
    %2425 = vmatpush1.msra.mxu0 0.0
    %2426 = vmatprep.subr.mxu0 0.0
    %2427 = vmatpush1.msra.mxu0 0.0
    %2428 = vmatprep.subr.mxu0 0.0
    %2429 = vmatpush1.msra.mxu0 0.0
    %2430 = vmatprep.subr.mxu0 0.0
    %2431 = vmatpush1.msra.mxu0 0.0
    %2432 = vmatprep.subr.mxu0 0.0
    %2433 = vmatpush1.msra.mxu0 0.0
    %2434 = vmatprep.subr.mxu0 0.0
    %2435 = vmatpush1.msra.mxu0 0.0
    %2436 = vmatprep.mubr.f32.mxu0 0.0
    %2437 = vmatmul.mubr.f32.gmra.mrb[0].mxu0 %v2001
    %v2438 = vpop.f32.mrb[0].mxu0
    %v2439 = vadd.f32 %v2214, %v2438
    %v2440 = vpop.f32.mrb[0].mxu0
    %2441 = vmatprep.mubr.f32.mxu0 0.0
    %2442 = vmatmul.mubr.f32.gmra.mrb[0].mxu0 %v2002
    %v2443 = vpop.f32.mrb[0].mxu0
    %v2444 = vadd.f32 %v2219, %v2443
    %v2445 = vpop.f32.mrb[0].mxu0
    %2446 = vmatprep.mubr.f32.mxu0 0.0
    %2447 = vmatmul.mubr.f32.gmra.mrb[0].mxu0 %v2003
    %v2448 = vpop.f32.mrb[0].mxu0
    %v2449 = vadd.f32 %v2224, %v2448
    %v2450 = vpop.f32.mrb[0].mxu0
    %2451 = vmatprep.mubr.f32.mxu0 0.0
    %2452 = vmatmul.mubr.f32.gmra.mrb[0].mxu0 %v2004
    %v2453 = vpop.f32.mrb[0].mxu0
    %v2454 = vadd.f32 %v2229, %v2453
    %v2455 = vpop.f32.mrb[0].mxu0
    %2456 = vmatprep.mubr.f32.mxu0 0.0
    %2457 = vmatmul.mubr.f32.gmra.mrb[0].mxu0 %v2005
    %v2458 = vpop.f32.mrb[0].mxu0
    %v2459 = vadd.f32 %v2234, %v2458
    %v2460 = vpop.f32.mrb[0].mxu0
    %2461 = vmatprep.mubr.f32.mxu0 0.0
    %2462 = vmatmul.mubr.f32.gmra.mrb[0].mxu0 %v2006
    %v2463 = vpop.f32.mrb[0].mxu0
    %v2464 = vadd.f32 %v2239, %v2463
    %v2465 = vpop.f32.mrb[0].mxu0
    %2466 = vmatprep.mubr.f32.mxu0 0.0
    %2467 = vmatmul.mubr.f32.gmra.mrb[0].mxu0 %v2007
    %v2468 = vpop.f32.mrb[0].mxu0
    %v2469 = vadd.f32 %v2244, %v2468
    %v2470 = vpop.f32.mrb[0].mxu0
    %2471 = vmatprep.mubr.f32.mxu0 0.0
    %2472 = vmatmul.mubr.f32.gmra.mrb[0].mxu0 %v2008
    %v2473 = vpop.f32.mrb[0].mxu0
    %v2474 = vadd.f32 %v2249, %v2473
    %v2475 = vpop.f32.mrb[0].mxu0
    %2476 = vmatprep.mubr.f32.mxu0 0.0
    %2477 = vmatmul.mubr.f32.gmra.mrb[0].mxu0 %v2009
    %v2478 = vpop.f32.mrb[0].mxu0
    %v2479 = vadd.f32 %v2254, %v2478
    %v2480 = vpop.f32.mrb[0].mxu0
    %2481 = vmatprep.mubr.f32.mxu0 0.0
    %2482 = vmatmul.mubr.f32.gmra.mrb[0].mxu0 %v2010
    %v2483 = vpop.f32.mrb[0].mxu0
    %v2484 = vadd.f32 %v2259, %v2483
    %v2485 = vpop.f32.mrb[0].mxu0
    %2486 = vmatprep.mubr.f32.mxu0 0.0
    %2487 = vmatmul.mubr.f32.gmra.mrb[0].mxu0 %v2011
    %v2488 = vpop.f32.mrb[0].mxu0
    %v2489 = vadd.f32 %v2264, %v2488
    %v2490 = vpop.f32.mrb[0].mxu0
    %2491 = vmatprep.mubr.f32.mxu0 0.0
    %2492 = vmatmul.mubr.f32.gmra.mrb[0].mxu0 %v2012
    %v2493 = vpop.f32.mrb[0].mxu0
    %v2494 = vadd.f32 %v2269, %v2493
    %v2495 = vpop.f32.mrb[0].mxu0
    %2496 = vmatprep.mubr.f32.mxu0 0.0
    %2497 = vmatmul.mubr.f32.gmra.mrb[0].mxu0 %v2013
    %v2498 = vpop.f32.mrb[0].mxu0
    %v2499 = vadd.f32 %v2274, %v2498
    %v2500 = vpop.f32.mrb[0].mxu0
    %2501 = vmatprep.mubr.f32.mxu0 0.0
    %2502 = vmatmul.mubr.f32.gmra.mrb[0].mxu0 %v2014
    %v2503 = vpop.f32.mrb[0].mxu0
    %v2504 = vadd.f32 %v2279, %v2503
    %v2505 = vpop.f32.mrb[0].mxu0
    %2506 = vmatprep.mubr.f32.mxu0 0.0
    %2507 = vmatmul.mubr.f32.gmra.mrb[0].mxu0 %v2015
    %v2508 = vpop.f32.mrb[0].mxu0
    %v2509 = vadd.f32 %v2284, %v2508
    %v2510 = vpop.f32.mrb[0].mxu0
    %2511 = vmatprep.mubr.f32.mxu0 0.0
    %2512 = vmatmul.mubr.f32.gmra.mrb[0].mxu0 %v2016
    %v2513 = vpop.f32.mrb[0].mxu0
    %v2514 = vadd.f32 %v2289, %v2513
    %v2515 = vpop.f32.mrb[0].mxu0
    %2516 = vmatprep.mubr.f32.mxu0 0.0
    %2517 = vmatmul.mubr.f32.gmra.mrb[0].mxu0 %v2017
    %v2518 = vpop.f32.mrb[0].mxu0
    %v2519 = vadd.f32 %v2294, %v2518
    %v2520 = vpop.f32.mrb[0].mxu0
    %2521 = vmatprep.mubr.f32.mxu0 0.0
    %2522 = vmatmul.mubr.f32.gmra.mrb[0].mxu0 %v2018
    %v2523 = vpop.f32.mrb[0].mxu0
    %v2524 = vadd.f32 %v2299, %v2523
    %v2525 = vpop.f32.mrb[0].mxu0
    %2526 = vmatprep.mubr.f32.mxu0 0.0
    %2527 = vmatmul.mubr.f32.gmra.mrb[0].mxu0 %v2019
    %v2528 = vpop.f32.mrb[0].mxu0
    %v2529 = vadd.f32 %v2304, %v2528
    %v2530 = vpop.f32.mrb[0].mxu0
    %2531 = vmatprep.mubr.f32.mxu0 0.0
    %2532 = vmatmul.mubr.f32.gmra.mrb[0].mxu0 %v2020
    %v2533 = vpop.f32.mrb[0].mxu0
    %v2534 = vadd.f32 %v2309, %v2533
    %v2535 = vpop.f32.mrb[0].mxu0
    %2536 = vmatprep.mubr.f32.mxu0 0.0
    %2537 = vmatmul.mubr.f32.gmra.mrb[0].mxu0 %v2021
    %v2538 = vpop.f32.mrb[0].mxu0
    %v2539 = vadd.f32 %v2314, %v2538
    %v2540 = vpop.f32.mrb[0].mxu0
    %2541 = vmatprep.mubr.f32.mxu0 0.0
    %2542 = vmatmul.mubr.f32.gmra.mrb[0].mxu0 %v2022
    %v2543 = vpop.f32.mrb[0].mxu0
    %v2544 = vadd.f32 %v2319, %v2543
    %v2545 = vpop.f32.mrb[0].mxu0
    %2546 = vmatprep.mubr.f32.mxu0 0.0
    %2547 = vmatmul.mubr.f32.gmra.mrb[0].mxu0 %v2023
    %v2548 = vpop.f32.mrb[0].mxu0
    %v2549 = vadd.f32 %v2324, %v2548
    %v2550 = vpop.f32.mrb[0].mxu0
    %2551 = vmatprep.mubr.f32.mxu0 0.0
    %2552 = vmatmul.mubr.f32.gmra.mrb[0].mxu0 %v2024
    %v2553 = vpop.f32.mrb[0].mxu0
    %v2554 = vadd.f32 %v2329, %v2553
    %v2555 = vpop.f32.mrb[0].mxu0
    %2556 = vmatprep.mubr.f32.mxu0 0.0
    %2557 = vmatmul.mubr.f32.gmra.mrb[0].mxu0 %v2025
    %v2558 = vpop.f32.mrb[0].mxu0
    %v2559 = vadd.f32 %v2334, %v2558
    %v2560 = vpop.f32.mrb[0].mxu0
    %2561 = vmatprep.mubr.f32.mxu0 0.0
    %2562 = vmatmul.mubr.f32.gmra.mrb[0].mxu0 %v2026
    %v2563 = vpop.f32.mrb[0].mxu0
    %v2564 = vadd.f32 %v2339, %v2563
    %v2565 = vpop.f32.mrb[0].mxu0
    %2566 = vmatprep.mubr.f32.mxu0 0.0
    %2567 = vmatmul.mubr.f32.gmra.mrb[0].mxu0 %v2027
    %v2568 = vpop.f32.mrb[0].mxu0
    %v2569 = vadd.f32 %v2344, %v2568
    %v2570 = vpop.f32.mrb[0].mxu0
    %2571 = vmatprep.mubr.f32.mxu0 0.0
    %2572 = vmatmul.mubr.f32.gmra.mrb[0].mxu0 %v2028
    %v2573 = vpop.f32.mrb[0].mxu0
    %v2574 = vadd.f32 %v2349, %v2573
    %v2575 = vpop.f32.mrb[0].mxu0
    %2576 = vmatprep.mubr.f32.mxu0 0.0
    %2577 = vmatmul.mubr.f32.gmra.mrb[0].mxu0 %v2029
    %v2578 = vpop.f32.mrb[0].mxu0
    %v2579 = vadd.f32 %v2354, %v2578
    %v2580 = vpop.f32.mrb[0].mxu0
    %2581 = vmatprep.mubr.f32.mxu0 0.0
    %2582 = vmatmul.mubr.f32.gmra.mrb[0].mxu0 %v2030
    %v2583 = vpop.f32.mrb[0].mxu0
    %v2584 = vadd.f32 %v2359, %v2583
    %v2585 = vpop.f32.mrb[0].mxu0
    %2586 = vmatprep.mubr.f32.mxu0 0.0
    %2587 = vmatmul.mubr.f32.gmra.mrb[0].mxu0 %v2031
    %v2588 = vpop.f32.mrb[0].mxu0
    %v2589 = vadd.f32 %v2364, %v2588
    %v2590 = vpop.f32.mrb[0].mxu0
    %2591 = vmatprep.mubr.f32.mxu0 0.0
    %2592 = vmatmul.mubr.f32.gmra.mrb[0].mxu0 %v2032
    %v2593 = vpop.f32.mrb[0].mxu0
    %v2594 = vadd.f32 %v2369, %v2593
    %v2595 = vpop.f32.mrb[0].mxu0
    %2596 = vdwg.mxu0
    %2597 = vst [vmem:[#allocation2] sm:$0xff] %v2439
    %2598 = vst [vmem:[#allocation2 + $0x8] sm:$0xff] %v2444
    %2599 = vst [vmem:[#allocation2 + $0x10] sm:$0xff] %v2449
    %2600 = vst [vmem:[#allocation2 + $0x18] sm:$0xff] %v2454
    %2601 = vst [vmem:[#allocation2 + $0x20] sm:$0xff] %v2459
    %2602 = vst [vmem:[#allocation2 + $0x28] sm:$0xff] %v2464
    %2603 = vst [vmem:[#allocation2 + $0x30] sm:$0xff] %v2469
    %2604 = vst [vmem:[#allocation2 + $0x38] sm:$0xff] %v2474
    %2605 = vst [vmem:[#allocation2 + $0x40] sm:$0xff] %v2479
    %2606 = vst [vmem:[#allocation2 + $0x48] sm:$0xff] %v2484
    %2607 = vst [vmem:[#allocation2 + $0x50] sm:$0xff] %v2489
    %2608 = vst [vmem:[#allocation2 + $0x58] sm:$0xff] %v2494
    %2609 = vst [vmem:[#allocation2 + $0x60] sm:$0xff] %v2499
    %2610 = vst [vmem:[#allocation2 + $0x68] sm:$0xff] %v2504
    %2611 = vst [vmem:[#allocation2 + $0x70] sm:$0xff] %v2509
    %2612 = vst [vmem:[#allocation2 + $0x78] sm:$0xff] %v2514
    %2613 = vst [vmem:[#allocation2 + $0x80] sm:$0xff] %v2519
    %2614 = vst [vmem:[#allocation2 + $0x88] sm:$0xff] %v2524
    %2615 = vst [vmem:[#allocation2 + $0x90] sm:$0xff] %v2529
    %2616 = vst [vmem:[#allocation2 + $0x98] sm:$0xff] %v2534
    %2617 = vst [vmem:[#allocation2 + $0xa0] sm:$0xff] %v2539
    %2618 = vst [vmem:[#allocation2 + $0xa8] sm:$0xff] %v2544
    %2619 = vst [vmem:[#allocation2 + $0xb0] sm:$0xff] %v2549
    %2620 = vst [vmem:[#allocation2 + $0xb8] sm:$0xff] %v2554
    %2621 = vst [vmem:[#allocation2 + $0xc0] sm:$0xff] %v2559
    %2622 = vst [vmem:[#allocation2 + $0xc8] sm:$0xff] %v2564
    %2623 = vst [vmem:[#allocation2 + $0xd0] sm:$0xff] %v2569
    %2624 = vst [vmem:[#allocation2 + $0xd8] sm:$0xff] %v2574
    %2625 = vst [vmem:[#allocation2 + $0xe0] sm:$0xff] %v2579
    %2626 = vst [vmem:[#allocation2 + $0xe8] sm:$0xff] %v2584
    %2627 = vst [vmem:[#allocation2 + $0xf0] sm:$0xff] %v2589
    %2628 = vst [vmem:[#allocation2 + $0xf8] sm:$0xff] %v2594
    // Predicated region
    $region46: #{tpu_custom_call.1} parent=1 // pred_check
      _
    $region47: #{tpu_custom_call.1} parent=1 // pred_check_branch
      %2630 = sbr.rel (0) target = $region49
    $region48: #{tpu_custom_call.1} parent=1 // pred_region
      %s2632 = ssub.s32 4096, 4096
      %2633 = vsyncadd [#allocation3], %s2632
      %s2634 = sshll.u32 [#allocation2], 4
      %s2635 = int_to_ptr.vmem [resolvable:$true] %s2634
      %2640 = dma.vmem_to_hbm [thread:$0]  %s2635, 4096, %s11, [#allocation3], 128, 128, 8
    $region49: #{tpu_custom_call.1} parent=1 // pred_fallthru
      _
    // Predicated region
    $region50: #{tpu_custom_call.1} parent=1 // pred_check
      _
    $region51: #{tpu_custom_call.1} parent=1 // pred_check_branch
      %2642 = sbr.rel (0) target = $region53
    $region52: #{tpu_custom_call.1} parent=1 // pred_region
      %2643 = dma.done [#allocation3], 4096
    $region53: #{tpu_custom_call.1} parent=1 // pred_fallthru
      _
    %2644 = vsyncpa [#allocation3], 1

</llo_original>
